<compile_context>
chip_gen: v6e
topology: v6e:2x2x1
jax: 0.10.0
libtpu: 0.0.40
codegen_flags: <defaults>
</compile_context>

<pallas_src>
import jax
import jax.numpy as jnp
from jax.experimental import pallas as pl
from jax.experimental.pallas import tpu as pltpu


# ----------------------------------------------------------------------------
# Kernels
# ----------------------------------------------------------------------------
def wmsa_fused_kernel(x_ref, r_ref,
                      w1t_ref, b1_ref, w2t_ref, b2_ref,
                      gw1t_ref, gb1_ref, gw2t_ref, gb2_ref,
                      o_ref):
    """One grid step = one full batch row [C, HW]; global branch fused."""
    x = x_ref[0].astype(jnp.float32)            # [C, HW]
    r = r_ref[0].astype(jnp.float32)            # [C, HW]
    f = x + r

    # local branch: 1x1 conv -> ReLU -> 1x1 conv (BN folded), N = HW
    h = jnp.maximum(
        jnp.dot(w1t_ref[...], f, preferred_element_type=jnp.float32)
        + b1_ref[...], 0.0)                                         # [Ci, HW]
    local = (jnp.dot(w2t_ref[...], h, preferred_element_type=jnp.float32)
             + b2_ref[...])                                         # [C, HW]

    # global branch (fused): avg-pool over the full HW + two tiny matmuls.
    # The pooled column is lane-broadcast to 128 so all matmul shapes stay in
    # the well-supported (sublane x 128-lane) regime; every column is
    # identical and column 0 is used.
    pooled = jnp.mean(f, axis=-1, keepdims=True)                    # [C, 1]
    pooled_b = jnp.broadcast_to(pooled, (pooled.shape[0], 128))     # [C, 128]
    gh = jnp.maximum(
        jnp.dot(gw1t_ref[...], pooled_b, preferred_element_type=jnp.float32)
        + gb1_ref[...], 0.0)                                        # [Ci, 128]
    g = (jnp.dot(gw2t_ref[...], gh, preferred_element_type=jnp.float32)
         + gb2_ref[...])                                            # [C, 128]

    w = jax.nn.sigmoid(local + g[:, 0:1])                           # [C, HW]
    o_ref[0] = (2.0 * (r + (x - r) * w)).astype(o_ref.dtype)


def wmsa_tiled_kernel(x_ref, r_ref, g_ref,
                      w1t_ref, b1_ref, w2t_ref, b2_ref,
                      o_ref):
    """Spatially tiled fallback; g = global feature precomputed in wrapper."""
    x = x_ref[0].astype(jnp.float32)            # [C, T]
    r = r_ref[0].astype(jnp.float32)            # [C, T]
    f = x + r
    h = jnp.maximum(
        jnp.dot(w1t_ref[...], f, preferred_element_type=jnp.float32)
        + b1_ref[...], 0.0)                                         # [Ci, T]
    local = (jnp.dot(w2t_ref[...], h, preferred_element_type=jnp.float32)
             + b2_ref[...])                                         # [C, T]
    w = jax.nn.sigmoid(local + g_ref[0])        # g block [1, C, 1] broadcast
    o_ref[0] = (2.0 * (r + (x - r) * w)).astype(o_ref.dtype)


# ----------------------------------------------------------------------------
# Wrapper
# ----------------------------------------------------------------------------
def _const_spec(shape):
    nd = len(shape)
    return pl.BlockSpec(shape, lambda *_: (0,) * nd)


def _compiler_params(semantics, vmem_estimate):
    kwargs = dict(dimension_semantics=semantics)
    if vmem_estimate > (12 << 20):
        # Only needed when tiles are grown past the conservative default
        # (v5e's scoped-VMEM default is 16 MiB). Cap well under physical.
        kwargs["vmem_limit_bytes"] = int(min(2 * vmem_estimate, 96 << 20))
    return pltpu.CompilerParams(**kwargs)


def wmsa_pallas(x_nchw, res_nchw, params, *,
                max_tile=4096,            # per-gen tunable (v7x/v6e: 8192 ok
                                          # with raised vmem_limit; v5e: 4096)
                fuse_vmem_budget=12 << 20):
    """x_nchw, res_nchw: [B, C, H, W] (f32 or bf16). params: BN-folded."""
    B, C, H, W = x_nchw.shape
    HW = H * W
    dtype = x_nchw.dtype
    itemsize = jnp.dtype(dtype).itemsize
    Ci = params["w1t"].shape[0]

    # NCHW -> [B, C, HW]  (free reshape, no transpose / extra HBM traffic)
    x = x_nchw.reshape(B, C, HW)
    r = res_nchw.astype(dtype).reshape(B, C, HW)

    weights = (params["w1t"], params["b1"], params["w2t"], params["b2"])
    weight_specs = [_const_spec((Ci, C)), _const_spec((Ci, 1)),
                    _const_spec((C, Ci)), _const_spec((C, 1))]

    flops = B * HW * (4 * C * Ci + 12 * C)
    cost = pl.CostEstimate(flops=flops,
                           transcendentals=B * C * HW,
                           bytes_accessed=3 * B * C * HW * itemsize
                           + 16 * C * Ci)

    # ---- fused-global path: whole batch row resident in VMEM ---------------
    fused_vmem = (3 * 2 * C * HW * itemsize        # x, r, out double-buffered
                  + (6 * C + 2 * Ci) * HW * 4)     # f32 intermediates
    if fused_vmem <= fuse_vmem_budget:
        # TODO(synk): for B == 1 on v7x (2 TensorCores) split HW across the
        # two cores (two-pass mean) so the second core is not idle.
        tile_spec = pl.BlockSpec((1, C, HW), lambda b: (b, 0, 0))
        gw_specs = [_const_spec((Ci, C)), _const_spec((Ci, 1)),
                    _const_spec((C, Ci)), _const_spec((C, 1))]
        out = pl.pallas_call(
            wmsa_fused_kernel,
            out_shape=jax.ShapeDtypeStruct((B, C, HW), dtype),
            grid_spec=pltpu.PrefetchScalarGridSpec(
                num_scalar_prefetch=0,
                grid=(B,),
                in_specs=[tile_spec, tile_spec] + weight_specs + gw_specs,
                out_specs=tile_spec),
            compiler_params=_compiler_params(("parallel",), fused_vmem),
            cost_estimate=cost,
        )(x, r, *weights,
          params["gw1t"], params["gb1"], params["gw2t"], params["gb2"])
        return out.reshape(B, C, H, W)

    # ---- tiled fallback: global branch in the wrapper (extra HBM pass) -----
    pooled = jnp.mean(x.astype(jnp.float32) + r.astype(jnp.float32), axis=2)
    gh = jnp.maximum(jnp.einsum("bc,ic->bi", pooled, params["gw1t"])
                     + params["gb1"][:, 0][None], 0.0)
    g = (jnp.einsum("bi,ci->bc", gh, params["gw2t"])
         + params["gb2"][:, 0][None])[:, :, None]                  # [B, C, 1]

    T = max(128, (max_tile // 128) * 128)     # lane-aligned spatial tile
    if HW <= T:
        T = HW                                # full-extent block (always legal)
    n_tiles = pl.cdiv(HW, T)                  # ragged last tile -> Pallas masks

    tile_spec = pl.BlockSpec((1, C, T), lambda b, s: (b, 0, s))
    g_spec = pl.BlockSpec((1, C, 1), lambda b, s: (b, 0, 0))
    tiled_vmem = 3 * 2 * C * T * itemsize + (6 * C + 2 * Ci) * T * 4

    out = pl.pallas_call(
        wmsa_tiled_kernel,
        out_shape=jax.ShapeDtypeStruct((B, C, HW), dtype),
        grid_spec=pltpu.PrefetchScalarGridSpec(
            num_scalar_prefetch=0,
            grid=(B, n_tiles),
            in_specs=[tile_spec, tile_spec, g_spec] + weight_specs,
            out_specs=tile_spec),
        compiler_params=_compiler_params(("parallel", "parallel"), tiled_vmem),
        cost_estimate=cost,
    )(x, r, g, *weights)
    return out.reshape(B, C, H, W)


# ----------------------------------------------------------------------------
# Deterministic parameter construction + BN (inference) folding.
# ----------------------------------------------------------------------------
def fold_conv_bn(w, b, gamma, beta, mean, var, eps=1e-5):
    """Fold BatchNorm (eval mode) into a 1x1 conv y = x @ w + b."""
    scale = gamma / jnp.sqrt(var + eps)
    return w * scale[None, :], (b - mean) * scale + beta


def make_params(key, channels, reduction_ratio):
    inter = channels // reduction_ratio
    keys = jax.random.split(key, 24)
    k = iter(keys)

    def conv(cin, cout):
        w = jax.random.normal(next(k), (cin, cout), jnp.float32) * 0.1
        b = jax.random.normal(next(k), (cout,), jnp.float32) * 0.05
        return w, b

    def bn(c):
        gamma = 1.0 + 0.1 * jax.random.normal(next(k), (c,), jnp.float32)
        beta = 0.05 * jax.random.normal(next(k), (c,), jnp.float32)
        mean = 0.05 * jax.random.normal(next(k), (c,), jnp.float32)
        var = 1.0 + 0.1 * jax.nn.softplus(
            jax.random.normal(next(k), (c,), jnp.float32))
        return gamma, beta, mean, var

    lw1, lb1 = conv(channels, inter)
    w1, b1 = fold_conv_bn(lw1, lb1, *bn(inter))
    lw2, lb2 = conv(inter, channels)
    w2, b2 = fold_conv_bn(lw2, lb2, *bn(channels))
    gw1_, gb1_ = conv(channels, inter)
    gw1, gb1 = fold_conv_bn(gw1_, gb1_, *bn(inter))
    gw2_, gb2_ = conv(inter, channels)
    gw2, gb2 = fold_conv_bn(gw2_, gb2_, *bn(channels))

    return {
        # Weights pre-transposed once on host for the [C, HW] layout; biases
        # stored as [*, 1] columns so they broadcast over the lane axis.
        "w1t": jnp.transpose(w1),   "b1": b1.reshape(inter, 1),
        "w2t": jnp.transpose(w2),   "b2": b2.reshape(channels, 1),
        "gw1t": jnp.transpose(gw1), "gb1": gb1.reshape(inter, 1),
        "gw2t": jnp.transpose(gw2), "gb2": gb2.reshape(channels, 1),
    }


# ----------------------------------------------------------------------------
# Pure-JAX reference (mirrors the PyTorch forward with BN-folded params).
# ----------------------------------------------------------------------------
def wmsa_reference(x_nchw, res_nchw, p):
    B, C, H, W = x_nchw.shape
    x = x_nchw.reshape(B, C, H * W).astype(jnp.float32)
    r = res_nchw.reshape(B, C, H * W).astype(jnp.float32)
    f = x + r
    h = jnp.maximum(jnp.einsum("ic,bcn->bin", p["w1t"], f) + p["b1"][None], 0.0)
    local = jnp.einsum("ci,bin->bcn", p["w2t"], h) + p["b2"][None]
    pooled = jnp.mean(f, axis=2)                                   # [B, C]
    gh = jnp.maximum(jnp.einsum("ic,bc->bi", p["gw1t"], pooled)
                     + p["gb1"][:, 0][None], 0.0)
    g = (jnp.einsum("ci,bi->bc", p["gw2t"], gh)
         + p["gb2"][:, 0][None])[:, :, None]                       # [B, C, 1]
    w = jax.nn.sigmoid(local + g)
    out = 2.0 * x * w + 2.0 * r * (1.0 - w)
    return out.reshape(B, C, H, W)


if __name__ == "__main__":
    channels = 64
    reduction_ratio = 4
    B, H, W = 2, 16, 16

    key = jax.random.PRNGKey(0)
    kx, kr, kp, kx2, kr2 = jax.random.split(key, 5)
    x = jax.random.normal(kx, (B, channels, H, W), jnp.float32)
    residual = jax.random.normal(kr, (B, channels, H, W), jnp.float32)
    params = make_params(kp, channels, reduction_ratio)

    ref = wmsa_reference(x, residual, params)

    # 1) fused-global path (default for small HW), f32
    out = jax.block_until_ready(wmsa_pallas(x, residual, params))
    assert out.shape == (B, channels, H, W)
    err = float(jnp.max(jnp.abs(out - ref)))
    assert jnp.allclose(out, ref, atol=2e-4, rtol=2e-4), err

    # 2) tiled fallback path (forced), ragged last spatial tile (HW=144, T=128)
    x2 = jax.random.normal(kx2, (B, channels, 12, 12), jnp.float32)
    r2 = jax.random.normal(kr2, (B, channels, 12, 12), jnp.float32)
    out2 = jax.block_until_ready(
        wmsa_pallas(x2, r2, params, fuse_vmem_budget=0, max_tile=128))
    ref2 = wmsa_reference(x2, r2, params)
    err2 = float(jnp.max(jnp.abs(out2 - ref2)))
    assert jnp.allclose(out2, ref2, atol=2e-4, rtol=2e-4), err2

    # 3) bf16 HBM storage (halved bandwidth); compare vs f32 math on the same
    #    bf16-quantized inputs with a loose tolerance.
    xb = x.astype(jnp.bfloat16)
    rb = residual.astype(jnp.bfloat16)
    out_b = jax.block_until_ready(wmsa_pallas(xb, rb, params))
    ref_b = wmsa_reference(xb.astype(jnp.float32), rb.astype(jnp.float32), params)
    err_b = float(jnp.max(jnp.abs(out_b.astype(jnp.float32) - ref_b)))
    assert jnp.allclose(out_b.astype(jnp.float32), ref_b,
                        atol=6e-2, rtol=6e-2), err_b

    print("KERNEL_OK")
</pallas_src>

<mosaic_0001>
module attributes {stable_mosaic.version = 11 : i64} {
  func.func @wmsa_fused_kernel(%arg0: i32, %arg1: memref<1x64x256xf32, #tpu.memory_space<vmem>>, %arg2: memref<1x64x256xf32, #tpu.memory_space<vmem>>, %arg3: memref<16x64xf32, #tpu.memory_space<vmem>>, %arg4: memref<16x1xf32, #tpu.memory_space<vmem>>, %arg5: memref<64x16xf32, #tpu.memory_space<vmem>>, %arg6: memref<64x1xf32, #tpu.memory_space<vmem>>, %arg7: memref<16x64xf32, #tpu.memory_space<vmem>>, %arg8: memref<16x1xf32, #tpu.memory_space<vmem>>, %arg9: memref<64x16xf32, #tpu.memory_space<vmem>>, %arg10: memref<64x1xf32, #tpu.memory_space<vmem>>, %arg11: memref<1x64x256xf32, #tpu.memory_space<vmem>>) attributes {dimension_semantics = [#tpu.dimension_semantics<parallel>], iteration_bounds = array<i64: 2>, scalar_prefetch = 0 : i64, scratch_operands = 0 : i64, tpu.core_type = #tpu.core_type<tc>, window_params = [{transform_indices = @transform_0, window_bounds = array<i64: 1, 64, 256>}, {transform_indices = @transform_1, window_bounds = array<i64: 1, 64, 256>}, {pipeline_mode = #tpu.pipeline_mode<synchronous>, transform_indices = @transform_2, window_bounds = array<i64: 16, 64>}, {pipeline_mode = #tpu.pipeline_mode<synchronous>, transform_indices = @transform_3, window_bounds = array<i64: 16, 1>}, {pipeline_mode = #tpu.pipeline_mode<synchronous>, transform_indices = @transform_4, window_bounds = array<i64: 64, 16>}, {pipeline_mode = #tpu.pipeline_mode<synchronous>, transform_indices = @transform_5, window_bounds = array<i64: 64, 1>}, {pipeline_mode = #tpu.pipeline_mode<synchronous>, transform_indices = @transform_6, window_bounds = array<i64: 16, 64>}, {pipeline_mode = #tpu.pipeline_mode<synchronous>, transform_indices = @transform_7, window_bounds = array<i64: 16, 1>}, {pipeline_mode = #tpu.pipeline_mode<synchronous>, transform_indices = @transform_8, window_bounds = array<i64: 64, 16>}, {pipeline_mode = #tpu.pipeline_mode<synchronous>, transform_indices = @transform_9, window_bounds = array<i64: 64, 1>}, {transform_indices = @transform_10, window_bounds = array<i64: 1, 64, 256>}]} {
    %c0 = arith.constant 0 : index
    %c0_0 = arith.constant 0 : index
    %c0_1 = arith.constant 0 : index
    %0 = vector.load %arg1[%c0, %c0_0, %c0_1] : memref<1x64x256xf32, #tpu.memory_space<vmem>>, vector<1x64x256xf32>
    %1 = vector.shape_cast %0 : vector<1x64x256xf32> to vector<64x256xf32>
    %c0_2 = arith.constant 0 : index
    %c0_3 = arith.constant 0 : index
    %c0_4 = arith.constant 0 : index
    %2 = vector.load %arg2[%c0_2, %c0_3, %c0_4] : memref<1x64x256xf32, #tpu.memory_space<vmem>>, vector<1x64x256xf32>
    %3 = vector.shape_cast %2 : vector<1x64x256xf32> to vector<64x256xf32>
    %4 = arith.addf %1, %3 : vector<64x256xf32>
    %c0_5 = arith.constant 0 : index
    %c0_6 = arith.constant 0 : index
    %5 = vector.load %arg3[%c0_5, %c0_6] : memref<16x64xf32, #tpu.memory_space<vmem>>, vector<16x64xf32>
    %cst = arith.constant dense<0.000000e+00> : vector<16x256xf32>
    %6 = tpu.matmul %5, %4, %cst {dimension_numbers = #tpu.dot_dimension_numbers<[1], [0], [0], [1], [0, 0, 1, 1], [], []>} : vector<16x64xf32>, vector<64x256xf32>, vector<16x256xf32> -> vector<16x256xf32>
    %c0_7 = arith.constant 0 : index
    %c0_8 = arith.constant 0 : index
    %7 = vector.load %arg4[%c0_7, %c0_8] : memref<16x1xf32, #tpu.memory_space<vmem>>, vector<16x1xf32>
    %8 = vector.broadcast %7 : vector<16x1xf32> to vector<16x256xf32>
    %9 = arith.addf %6, %8 : vector<16x256xf32>
    %cst_9 = arith.constant 0.000000e+00 : f32
    %10 = vector.broadcast %cst_9 : f32 to vector<16x256xf32>
    %11 = arith.maximumf %9, %10 : vector<16x256xf32>
    %c0_10 = arith.constant 0 : index
    %c0_11 = arith.constant 0 : index
    %12 = vector.load %arg5[%c0_10, %c0_11] : memref<64x16xf32, #tpu.memory_space<vmem>>, vector<64x16xf32>
    %cst_12 = arith.constant dense<0.000000e+00> : vector<64x256xf32>
    %13 = tpu.matmul %12, %11, %cst_12 {dimension_numbers = #tpu.dot_dimension_numbers<[1], [0], [0], [1], [0, 0, 1, 1], [], []>} : vector<64x16xf32>, vector<16x256xf32>, vector<64x256xf32> -> vector<64x256xf32>
    %c0_13 = arith.constant 0 : index
    %c0_14 = arith.constant 0 : index
    %14 = vector.load %arg6[%c0_13, %c0_14] : memref<64x1xf32, #tpu.memory_space<vmem>>, vector<64x1xf32>
    %15 = vector.broadcast %14 : vector<64x1xf32> to vector<64x256xf32>
    %16 = arith.addf %13, %15 : vector<64x256xf32>
    %cst_15 = arith.constant dense<0.000000e+00> : vector<64xf32>
    %17 = vector.multi_reduction <add>, %4, %cst_15 [1] : vector<64x256xf32> to vector<64xf32>
    %18 = vector.shape_cast %17 : vector<64xf32> to vector<64x1xf32>
    %cst_16 = arith.constant 2.560000e+02 : f32
    %19 = vector.broadcast %cst_16 : f32 to vector<64x1xf32>
    %20 = arith.divf %18, %19 : vector<64x1xf32>
    %21 = vector.shape_cast %20 : vector<64x1xf32> to vector<64x1xf32>
    %22 = vector.broadcast %21 : vector<64x1xf32> to vector<64x128xf32>
    %c0_17 = arith.constant 0 : index
    %c0_18 = arith.constant 0 : index
    %23 = vector.load %arg7[%c0_17, %c0_18] : memref<16x64xf32, #tpu.memory_space<vmem>>, vector<16x64xf32>
    %cst_19 = arith.constant dense<0.000000e+00> : vector<16x128xf32>
    %24 = tpu.matmul %23, %22, %cst_19 {dimension_numbers = #tpu.dot_dimension_numbers<[1], [0], [0], [1], [0, 0, 1, 1], [], []>} : vector<16x64xf32>, vector<64x128xf32>, vector<16x128xf32> -> vector<16x128xf32>
    %c0_20 = arith.constant 0 : index
    %c0_21 = arith.constant 0 : index
    %25 = vector.load %arg8[%c0_20, %c0_21] : memref<16x1xf32, #tpu.memory_space<vmem>>, vector<16x1xf32>
    %26 = vector.broadcast %25 : vector<16x1xf32> to vector<16x128xf32>
    %27 = arith.addf %24, %26 : vector<16x128xf32>
    %cst_22 = arith.constant 0.000000e+00 : f32
    %28 = vector.broadcast %cst_22 : f32 to vector<16x128xf32>
    %29 = arith.maximumf %27, %28 : vector<16x128xf32>
    %c0_23 = arith.constant 0 : index
    %c0_24 = arith.constant 0 : index
    %30 = vector.load %arg9[%c0_23, %c0_24] : memref<64x16xf32, #tpu.memory_space<vmem>>, vector<64x16xf32>
    %cst_25 = arith.constant dense<0.000000e+00> : vector<64x128xf32>
    %31 = tpu.matmul %30, %29, %cst_25 {dimension_numbers = #tpu.dot_dimension_numbers<[1], [0], [0], [1], [0, 0, 1, 1], [], []>} : vector<64x16xf32>, vector<16x128xf32>, vector<64x128xf32> -> vector<64x128xf32>
    %c0_26 = arith.constant 0 : index
    %c0_27 = arith.constant 0 : index
    %32 = vector.load %arg10[%c0_26, %c0_27] : memref<64x1xf32, #tpu.memory_space<vmem>>, vector<64x1xf32>
    %33 = vector.broadcast %32 : vector<64x1xf32> to vector<64x128xf32>
    %34 = arith.addf %31, %33 : vector<64x128xf32>
    %35 = vector.extract_strided_slice %34 {offsets = [0, 0], sizes = [64, 1], strides = [1, 1]} : vector<64x128xf32> to vector<64x1xf32>
    %36 = vector.broadcast %35 : vector<64x1xf32> to vector<64x256xf32>
    %37 = arith.addf %16, %36 : vector<64x256xf32>
    %38 = arith.negf %37 : vector<64x256xf32>
    %39 = math.exp %38 : vector<64x256xf32>
    %cst_28 = arith.constant 1.000000e+00 : f32
    %40 = vector.broadcast %cst_28 : f32 to vector<64x256xf32>
    %41 = arith.addf %40, %39 : vector<64x256xf32>
    %42 = arith.divf %40, %41 : vector<64x256xf32>
    %43 = arith.subf %1, %3 : vector<64x256xf32>
    %44 = arith.mulf %43, %42 : vector<64x256xf32>
    %45 = arith.addf %3, %44 : vector<64x256xf32>
    %cst_29 = arith.constant 2.000000e+00 : f32
    %46 = vector.broadcast %cst_29 : f32 to vector<64x256xf32>
    %47 = arith.mulf %46, %45 : vector<64x256xf32>
    %c0_30 = arith.constant 0 : index
    %c0_31 = arith.constant 0 : index
    %c0_32 = arith.constant 0 : index
    %48 = vector.load %arg11[%c0_30, %c0_31, %c0_32] : memref<1x64x256xf32, #tpu.memory_space<vmem>>, vector<1x64x256xf32>
    %49 = vector.shape_cast %48 : vector<1x64x256xf32> to vector<64x256xf32>
    %50 = vector.shape_cast %47 : vector<64x256xf32> to vector<1x64x256xf32>
    tpu.vector_store %arg11[%c0_30, %c0_31, %c0_32], %50 {strides = array<i32>} : memref<1x64x256xf32, #tpu.memory_space<vmem>>, vector<1x64x256xf32>,
    return
  }
  func.func @transform_0(%arg0: i32) -> (i32, i32, i32) {
    %c0_i32 = arith.constant 0 : i32
    %c0_i32_0 = arith.constant 0 : i32
    %c0_i32_1 = arith.constant 0 : i32
    return %arg0, %c0_i32, %c0_i32_0 : i32, i32, i32
  }
  func.func @transform_1(%arg0: i32) -> (i32, i32, i32) {
    %c0_i32 = arith.constant 0 : i32
    %c0_i32_0 = arith.constant 0 : i32
    %c0_i32_1 = arith.constant 0 : i32
    return %arg0, %c0_i32, %c0_i32_0 : i32, i32, i32
  }
  func.func @transform_2(%arg0: i32) -> (i32, i32) {
    %c0_i32 = arith.constant 0 : i32
    %c0_i32_0 = arith.constant 0 : i32
    %c0_i32_1 = arith.constant 0 : i32
    return %c0_i32, %c0_i32_0 : i32, i32
  }
  func.func @transform_3(%arg0: i32) -> (i32, i32) {
    %c0_i32 = arith.constant 0 : i32
    %c0_i32_0 = arith.constant 0 : i32
    %c0_i32_1 = arith.constant 0 : i32
    return %c0_i32, %c0_i32_0 : i32, i32
  }
  func.func @transform_4(%arg0: i32) -> (i32, i32) {
    %c0_i32 = arith.constant 0 : i32
    %c0_i32_0 = arith.constant 0 : i32
    %c0_i32_1 = arith.constant 0 : i32
    return %c0_i32, %c0_i32_0 : i32, i32
  }
  func.func @transform_5(%arg0: i32) -> (i32, i32) {
    %c0_i32 = arith.constant 0 : i32
    %c0_i32_0 = arith.constant 0 : i32
    %c0_i32_1 = arith.constant 0 : i32
    return %c0_i32, %c0_i32_0 : i32, i32
  }
  func.func @transform_6(%arg0: i32) -> (i32, i32) {
    %c0_i32 = arith.constant 0 : i32
    %c0_i32_0 = arith.constant 0 : i32
    %c0_i32_1 = arith.constant 0 : i32
    return %c0_i32, %c0_i32_0 : i32, i32
  }
  func.func @transform_7(%arg0: i32) -> (i32, i32) {
    %c0_i32 = arith.constant 0 : i32
    %c0_i32_0 = arith.constant 0 : i32
    %c0_i32_1 = arith.constant 0 : i32
    return %c0_i32, %c0_i32_0 : i32, i32
  }
  func.func @transform_8(%arg0: i32) -> (i32, i32) {
    %c0_i32 = arith.constant 0 : i32
    %c0_i32_0 = arith.constant 0 : i32
    %c0_i32_1 = arith.constant 0 : i32
    return %c0_i32, %c0_i32_0 : i32, i32
  }
  func.func @transform_9(%arg0: i32) -> (i32, i32) {
    %c0_i32 = arith.constant 0 : i32
    %c0_i32_0 = arith.constant 0 : i32
    %c0_i32_1 = arith.constant 0 : i32
    return %c0_i32, %c0_i32_0 : i32, i32
  }
  func.func @transform_10(%arg0: i32) -> (i32, i32, i32) {
    %c0_i32 = arith.constant 0 : i32
    %c0_i32_0 = arith.constant 0 : i32
    %c0_i32_1 = arith.constant 0 : i32
    return %arg0, %c0_i32, %c0_i32_0 : i32, i32, i32
  }
}

</mosaic_0001>

<llo_original>
// kernel: tpu_custom_call.1
$region0: #{tpu_custom_call.1}
  #allocation0 [shape = 'u32[]', space=smem, size = 0x4, offset = 0x4, fixed_abs, tag = 'smem constant byte address 0x4 - core index']
  #allocation1 [shape = 'u32[144,128]{1,0:T(1,128)}', space=vmem, size = 0x12000, scoped, tag = 'internal scratch']
  %s0 = inlined_call_operand.vmem [shape: f32[2,64,256], index: 0, kind: input, shape index: {}]
  %s1 = inlined_call_operand.hbm [shape: f32[2,64,256], index: 1, kind: input, shape index: {}]
  %s2 = inlined_call_operand.vmem [shape: f32[16,64], index: 2, kind: input, shape index: {}]
  %s3 = inlined_call_operand.vmem [shape: f32[16,1], index: 3, kind: input, shape index: {}]
  %s4 = inlined_call_operand.vmem [shape: f32[64,16], index: 4, kind: input, shape index: {}]
  %s5 = inlined_call_operand.vmem [shape: f32[64,1], index: 5, kind: input, shape index: {}]
  %s6 = inlined_call_operand.vmem [shape: f32[16,64], index: 6, kind: input, shape index: {}]
  %s7 = inlined_call_operand.vmem [shape: f32[16,1], index: 7, kind: input, shape index: {}]
  %s8 = inlined_call_operand.vmem [shape: f32[64,16], index: 8, kind: input, shape index: {}]
  %s9 = inlined_call_operand.vmem [shape: f32[64,1], index: 9, kind: input, shape index: {}]
  %s10 = inlined_call_operand.hbm [shape: f32[2,64,256], index: 10, kind: output, shape index: {}]
  %s11 = sld [smem:[#allocation0]]
  $region77: #{tpu_custom_call.1} parent=0
    _
  %s13 = ssub.s32 1, %s11
  %s14 = scalar_select 0, %s13, %s11
  $region1: #{tpu_custom_call.1} parent=0
    #allocation2 [shape = 'u8[131072]{0}', space=vmem, size = 0x20000, scoped, tag = 'input window, operand 1']
    #allocation3 [shape = 's32[2]{0}', space=sflag, size = 0x8, scoped, tag = 'scoped memory for tpu_custom_call.1']
    #allocation4 [shape = 's32[2]{0}', space=sflag, size = 0x8, scoped, tag = 'scoped memory for tpu_custom_call.1']
    #allocation5 [shape = 'u8[131072]{0}', space=vmem, size = 0x20000, scoped, tag = 'output window, operand 0']
    %15 = vsyncpa [#allocation3], 0
    %s16 = scalar_lea.sflag [#allocation3], 1
    %17 = vsyncpa %s16, 0
    %18 = vsyncpa [#allocation4], 0
    %s19 = scalar_lea.sflag [#allocation4], 1
    %20 = vsyncpa %s19, 0
    loop: start=0, step=1, limit=4
    $region2: #{tpu_custom_call.1} parent=1 // loop_pre_header
      _
    $region3: #{tpu_custom_call.1} parent=1 // loop_header
      %s22 = sphi 0, %s26
      %p23 = scmp.ge.s32.totalorder %s22, 4
      %s32 = sphi 0, %s34
      %s35 = sphi 0, %s32
      %s36 = sphi 0, %s35
      %s52 = sphi 0, %s36
      %s58 = sphi 0, %s60
      %s61 = sphi 0, %s58
      %s62 = sphi 0, %s61
      %s78 = sphi 0, %s62
      %s82 = sphi 0, %s82
      %s84 = sphi 0, %s82
      %s85 = sphi 0, %s84
      %s99 = sphi 0, %s85
      %s103 = sphi 0, %s103
      %s105 = sphi 0, %s103
      %s106 = sphi 0, %s105
      %s120 = sphi 0, %s106
      %s124 = sphi 0, %s124
      %s126 = sphi 0, %s124
      %s127 = sphi 0, %s126
      %s141 = sphi 0, %s127
      %s145 = sphi 0, %s145
      %s147 = sphi 0, %s145
      %s148 = sphi 0, %s147
      %s162 = sphi 0, %s148
      %s166 = sphi 0, %s166
      %s168 = sphi 0, %s166
      %s169 = sphi 0, %s168
      %s183 = sphi 0, %s169
      %s187 = sphi 0, %s187
      %s189 = sphi 0, %s187
      %s190 = sphi 0, %s189
      %s204 = sphi 0, %s190
      %s208 = sphi 0, %s208
      %s210 = sphi 0, %s208
      %s211 = sphi 0, %s210
      %s225 = sphi 0, %s211
      %s229 = sphi 0, %s229
      %s231 = sphi 0, %s229
      %s232 = sphi 0, %s231
      %s246 = sphi 0, %s232
      %s252 = sphi 0, %s254
      %s255 = sphi 0, %s252
      %s256 = sphi 0, %s255
      %s272 = sphi 0, %s256
    $region4: #{tpu_custom_call.1} parent=1 // loop_header_branch
      %25 = sbr.rel (%p23) target = $region8
    $region5: #{tpu_custom_call.1} parent=1 // loop_body
      %s27 = ssub.s32 %s22, 1
      %s28 = ssub.s32 %s22, 2
      %s29 = sadd.s32 %s22, 1
      %s30 = ssub.s32 %s22, %s29
      %p31 = scmp.eq.s32.totalorder %s30, 0
      %s33 = sadd.s32 %s32, 1
      %s34 = scalar_select %p31, %s32, %s33
      %p37 = pneg %p31
      %p38 = scmp.eq.s32.totalorder %s22, 1
      %p39 = por %p37, %p38
      %p40 = scmp.ne.s32.totalorder %s32, %s35
      %p41 = scmp.eq.s32.totalorder %s22, 0
      %p42 = por %p40, %p41
      %p43 = scmp.ne.s32.totalorder %s32, %s35
      %p44 = scmp.eq.s32.totalorder %s27, 1
      %p45 = por %p43, %p44
      %p46 = scmp.ne.s32.totalorder %s35, %s36
      %p47 = scmp.eq.s32.totalorder %s27, 0
      %p48 = por %p46, %p47
      %p49 = scmp.ne.s32.totalorder %s35, %s36
      %p50 = scmp.eq.s32.totalorder %s28, 1
      %p51 = por %p49, %p50
      %p53 = scmp.ne.s32.totalorder %s36, %s52
      %p54 = scmp.eq.s32.totalorder %s28, 0
      %p55 = por %p53, %p54
      %s56 = ssub.s32 %s22, %s29
      %p57 = scmp.eq.s32.totalorder %s56, 0
      %s59 = sadd.s32 %s58, 1
      %s60 = scalar_select %p57, %s58, %s59
      %p63 = pneg %p57
      %p64 = scmp.eq.s32.totalorder %s22, 1
      %p65 = por %p63, %p64
      %p66 = scmp.ne.s32.totalorder %s58, %s61
      %p67 = scmp.eq.s32.totalorder %s22, 0
      %p68 = por %p66, %p67
      %p69 = scmp.ne.s32.totalorder %s58, %s61
      %p70 = scmp.eq.s32.totalorder %s27, 1
      %p71 = por %p69, %p70
      %p72 = scmp.ne.s32.totalorder %s61, %s62
      %p73 = scmp.eq.s32.totalorder %s27, 0
      %p74 = por %p72, %p73
      %p75 = scmp.ne.s32.totalorder %s61, %s62
      %p76 = scmp.eq.s32.totalorder %s28, 1
      %p77 = por %p75, %p76
      %p79 = scmp.ne.s32.totalorder %s62, %s78
      %p80 = scmp.eq.s32.totalorder %s28, 0
      %p81 = por %p79, %p80
      %s83 = sadd.s32 %s82, 1
      %p86 = scmp.eq.s32.totalorder %s22, 1
      %p87 = scmp.ne.s32.totalorder %s82, %s84
      %p88 = scmp.eq.s32.totalorder %s22, 0
      %p89 = por %p87, %p88
      %p90 = scmp.ne.s32.totalorder %s82, %s84
      %p91 = scmp.eq.s32.totalorder %s27, 1
      %p92 = por %p90, %p91
      %p93 = scmp.ne.s32.totalorder %s84, %s85
      %p94 = scmp.eq.s32.totalorder %s27, 0
      %p95 = por %p93, %p94
      %p96 = scmp.ne.s32.totalorder %s84, %s85
      %p97 = scmp.eq.s32.totalorder %s28, 1
      %p98 = por %p96, %p97
      %p100 = scmp.ne.s32.totalorder %s85, %s99
      %p101 = scmp.eq.s32.totalorder %s28, 0
      %p102 = por %p100, %p101
      %s104 = sadd.s32 %s103, 1
      %p107 = scmp.eq.s32.totalorder %s22, 1
      %p108 = scmp.ne.s32.totalorder %s103, %s105
      %p109 = scmp.eq.s32.totalorder %s22, 0
      %p110 = por %p108, %p109
      %p111 = scmp.ne.s32.totalorder %s103, %s105
      %p112 = scmp.eq.s32.totalorder %s27, 1
      %p113 = por %p111, %p112
      %p114 = scmp.ne.s32.totalorder %s105, %s106
      %p115 = scmp.eq.s32.totalorder %s27, 0
      %p116 = por %p114, %p115
      %p117 = scmp.ne.s32.totalorder %s105, %s106
      %p118 = scmp.eq.s32.totalorder %s28, 1
      %p119 = por %p117, %p118
      %p121 = scmp.ne.s32.totalorder %s106, %s120
      %p122 = scmp.eq.s32.totalorder %s28, 0
      %p123 = por %p121, %p122
      %s125 = sadd.s32 %s124, 1
      %p128 = scmp.eq.s32.totalorder %s22, 1
      %p129 = scmp.ne.s32.totalorder %s124, %s126
      %p130 = scmp.eq.s32.totalorder %s22, 0
      %p131 = por %p129, %p130
      %p132 = scmp.ne.s32.totalorder %s124, %s126
      %p133 = scmp.eq.s32.totalorder %s27, 1
      %p134 = por %p132, %p133
      %p135 = scmp.ne.s32.totalorder %s126, %s127
      %p136 = scmp.eq.s32.totalorder %s27, 0
      %p137 = por %p135, %p136
      %p138 = scmp.ne.s32.totalorder %s126, %s127
      %p139 = scmp.eq.s32.totalorder %s28, 1
      %p140 = por %p138, %p139
      %p142 = scmp.ne.s32.totalorder %s127, %s141
      %p143 = scmp.eq.s32.totalorder %s28, 0
      %p144 = por %p142, %p143
      %s146 = sadd.s32 %s145, 1
      %p149 = scmp.eq.s32.totalorder %s22, 1
      %p150 = scmp.ne.s32.totalorder %s145, %s147
      %p151 = scmp.eq.s32.totalorder %s22, 0
      %p152 = por %p150, %p151
      %p153 = scmp.ne.s32.totalorder %s145, %s147
      %p154 = scmp.eq.s32.totalorder %s27, 1
      %p155 = por %p153, %p154
      %p156 = scmp.ne.s32.totalorder %s147, %s148
      %p157 = scmp.eq.s32.totalorder %s27, 0
      %p158 = por %p156, %p157
      %p159 = scmp.ne.s32.totalorder %s147, %s148
      %p160 = scmp.eq.s32.totalorder %s28, 1
      %p161 = por %p159, %p160
      %p163 = scmp.ne.s32.totalorder %s148, %s162
      %p164 = scmp.eq.s32.totalorder %s28, 0
      %p165 = por %p163, %p164
      %s167 = sadd.s32 %s166, 1
      %p170 = scmp.eq.s32.totalorder %s22, 1
      %p171 = scmp.ne.s32.totalorder %s166, %s168
      %p172 = scmp.eq.s32.totalorder %s22, 0
      %p173 = por %p171, %p172
      %p174 = scmp.ne.s32.totalorder %s166, %s168
      %p175 = scmp.eq.s32.totalorder %s27, 1
      %p176 = por %p174, %p175
      %p177 = scmp.ne.s32.totalorder %s168, %s169
      %p178 = scmp.eq.s32.totalorder %s27, 0
      %p179 = por %p177, %p178
      %p180 = scmp.ne.s32.totalorder %s168, %s169
      %p181 = scmp.eq.s32.totalorder %s28, 1
      %p182 = por %p180, %p181
      %p184 = scmp.ne.s32.totalorder %s169, %s183
      %p185 = scmp.eq.s32.totalorder %s28, 0
      %p186 = por %p184, %p185
      %s188 = sadd.s32 %s187, 1
      %p191 = scmp.eq.s32.totalorder %s22, 1
      %p192 = scmp.ne.s32.totalorder %s187, %s189
      %p193 = scmp.eq.s32.totalorder %s22, 0
      %p194 = por %p192, %p193
      %p195 = scmp.ne.s32.totalorder %s187, %s189
      %p196 = scmp.eq.s32.totalorder %s27, 1
      %p197 = por %p195, %p196
      %p198 = scmp.ne.s32.totalorder %s189, %s190
      %p199 = scmp.eq.s32.totalorder %s27, 0
      %p200 = por %p198, %p199
      %p201 = scmp.ne.s32.totalorder %s189, %s190
      %p202 = scmp.eq.s32.totalorder %s28, 1
      %p203 = por %p201, %p202
      %p205 = scmp.ne.s32.totalorder %s190, %s204
      %p206 = scmp.eq.s32.totalorder %s28, 0
      %p207 = por %p205, %p206
      %s209 = sadd.s32 %s208, 1
      %p212 = scmp.eq.s32.totalorder %s22, 1
      %p213 = scmp.ne.s32.totalorder %s208, %s210
      %p214 = scmp.eq.s32.totalorder %s22, 0
      %p215 = por %p213, %p214
      %p216 = scmp.ne.s32.totalorder %s208, %s210
      %p217 = scmp.eq.s32.totalorder %s27, 1
      %p218 = por %p216, %p217
      %p219 = scmp.ne.s32.totalorder %s210, %s211
      %p220 = scmp.eq.s32.totalorder %s27, 0
      %p221 = por %p219, %p220
      %p222 = scmp.ne.s32.totalorder %s210, %s211
      %p223 = scmp.eq.s32.totalorder %s28, 1
      %p224 = por %p222, %p223
      %p226 = scmp.ne.s32.totalorder %s211, %s225
      %p227 = scmp.eq.s32.totalorder %s28, 0
      %p228 = por %p226, %p227
      %s230 = sadd.s32 %s229, 1
      %p233 = scmp.eq.s32.totalorder %s22, 1
      %p234 = scmp.ne.s32.totalorder %s229, %s231
      %p235 = scmp.eq.s32.totalorder %s22, 0
      %p236 = por %p234, %p235
      %p237 = scmp.ne.s32.totalorder %s229, %s231
      %p238 = scmp.eq.s32.totalorder %s27, 1
      %p239 = por %p237, %p238
      %p240 = scmp.ne.s32.totalorder %s231, %s232
      %p241 = scmp.eq.s32.totalorder %s27, 0
      %p242 = por %p240, %p241
      %p243 = scmp.ne.s32.totalorder %s231, %s232
      %p244 = scmp.eq.s32.totalorder %s28, 1
      %p245 = por %p243, %p244
      %p247 = scmp.ne.s32.totalorder %s232, %s246
      %p248 = scmp.eq.s32.totalorder %s28, 0
      %p249 = por %p247, %p248
      %s250 = ssub.s32 %s22, %s29
      %p251 = scmp.eq.s32.totalorder %s250, 0
      %s253 = sadd.s32 %s252, 1
      %s254 = scalar_select %p251, %s252, %s253
      %p257 = pneg %p251
      %p258 = scmp.eq.s32.totalorder %s22, 1
      %p259 = por %p257, %p258
      %p260 = scmp.ne.s32.totalorder %s252, %s255
      %p261 = scmp.eq.s32.totalorder %s22, 0
      %p262 = por %p260, %p261
      %p263 = scmp.ne.s32.totalorder %s252, %s255
      %p264 = scmp.eq.s32.totalorder %s27, 1
      %p265 = por %p263, %p264
      %p266 = scmp.ne.s32.totalorder %s255, %s256
      %p267 = scmp.eq.s32.totalorder %s27, 0
      %p268 = por %p266, %p267
      %p269 = scmp.ne.s32.totalorder %s255, %s256
      %p270 = scmp.eq.s32.totalorder %s28, 1
      %p271 = por %p269, %p270
      %p273 = scmp.ne.s32.totalorder %s256, %s272
      %p274 = scmp.eq.s32.totalorder %s28, 0
      %p275 = por %p273, %p274
      %p276 = scmp.le.s32.totalorder 1, %s22
      %p277 = scmp.lt.s32.totalorder %s22, 3
      %p278 = pnand %p276, %p277
      %p279 = pneg %p278
      // Predicated region
      $region9: #{tpu_custom_call.1} parent=5 // pred_check
        _
      $region10: #{tpu_custom_call.1} parent=5 // pred_check_branch
        %281 = sbr.rel (%p278) target = $region12
      $region11: #{tpu_custom_call.1} parent=5 // pred_region
        %s282 = ssub.s32 %s22, 1
        // Predicated region
        $region13: #{tpu_custom_call.1} parent=11 // pred_check
          %p283 = pneg %p95
        $region14: #{tpu_custom_call.1} parent=11 // pred_check_branch
          %285 = sbr.rel (%p283) target = $region16
        $region15: #{tpu_custom_call.1} parent=11 // pred_region
          _
        $region16: #{tpu_custom_call.1} parent=11 // pred_fallthru
          _
        // Predicated region
        $region17: #{tpu_custom_call.1} parent=11 // pred_check
          %p286 = pneg %p116
        $region18: #{tpu_custom_call.1} parent=11 // pred_check_branch
          %288 = sbr.rel (%p286) target = $region20
        $region19: #{tpu_custom_call.1} parent=11 // pred_region
          _
        $region20: #{tpu_custom_call.1} parent=11 // pred_fallthru
          _
        // Predicated region
        $region21: #{tpu_custom_call.1} parent=11 // pred_check
          %p289 = pneg %p137
        $region22: #{tpu_custom_call.1} parent=11 // pred_check_branch
          %291 = sbr.rel (%p289) target = $region24
        $region23: #{tpu_custom_call.1} parent=11 // pred_region
          _
        $region24: #{tpu_custom_call.1} parent=11 // pred_fallthru
          _
        // Predicated region
        $region25: #{tpu_custom_call.1} parent=11 // pred_check
          %p292 = pneg %p158
        $region26: #{tpu_custom_call.1} parent=11 // pred_check_branch
          %294 = sbr.rel (%p292) target = $region28
        $region27: #{tpu_custom_call.1} parent=11 // pred_region
          _
        $region28: #{tpu_custom_call.1} parent=11 // pred_fallthru
          _
        // Predicated region
        $region29: #{tpu_custom_call.1} parent=11 // pred_check
          %p295 = pneg %p179
        $region30: #{tpu_custom_call.1} parent=11 // pred_check_branch
          %297 = sbr.rel (%p295) target = $region32
        $region31: #{tpu_custom_call.1} parent=11 // pred_region
          _
        $region32: #{tpu_custom_call.1} parent=11 // pred_fallthru
          _
        // Predicated region
        $region33: #{tpu_custom_call.1} parent=11 // pred_check
          %p298 = pneg %p200
        $region34: #{tpu_custom_call.1} parent=11 // pred_check_branch
          %300 = sbr.rel (%p298) target = $region36
        $region35: #{tpu_custom_call.1} parent=11 // pred_region
          _
        $region36: #{tpu_custom_call.1} parent=11 // pred_fallthru
          _
        // Predicated region
        $region37: #{tpu_custom_call.1} parent=11 // pred_check
          %p301 = pneg %p221
        $region38: #{tpu_custom_call.1} parent=11 // pred_check_branch
          %303 = sbr.rel (%p301) target = $region40
        $region39: #{tpu_custom_call.1} parent=11 // pred_region
          _
        $region40: #{tpu_custom_call.1} parent=11 // pred_fallthru
          _
        // Predicated region
        $region41: #{tpu_custom_call.1} parent=11 // pred_check
          %p304 = pneg %p242
        $region42: #{tpu_custom_call.1} parent=11 // pred_check_branch
          %306 = sbr.rel (%p304) target = $region44
        $region43: #{tpu_custom_call.1} parent=11 // pred_region
          _
        $region44: #{tpu_custom_call.1} parent=11 // pred_fallthru
          _
      $region12: #{tpu_custom_call.1} parent=5 // pred_fallthru
        _
      %p307 = scmp.lt.s32.totalorder %s22, 2
      // Predicated region
      $region45: #{tpu_custom_call.1} parent=5 // pred_check
        %p308 = pneg %p307
      $region46: #{tpu_custom_call.1} parent=5 // pred_check_branch
        %310 = sbr.rel (%p308) target = $region48
      $region47: #{tpu_custom_call.1} parent=5 // pred_region
        // Predicated region
        $region49: #{tpu_custom_call.1} parent=47 // pred_check
          %p311 = pneg %p42
        $region50: #{tpu_custom_call.1} parent=47 // pred_check_branch
          %313 = sbr.rel (%p311) target = $region52
        $region51: #{tpu_custom_call.1} parent=47 // pred_region
          %p314 = scmp.lt.s32.totalorder %s22, 1
          %s315 = scalar_select %p314, %s22, 1
          %s316 = smul.addr %s315, 16
          %s317 = smul.addr %s316, 8
          %s318 = scalar_lea.vmem %s0, %s317
        $region52: #{tpu_custom_call.1} parent=47 // pred_fallthru
          _
        // Predicated region
        $region53: #{tpu_custom_call.1} parent=47 // pred_check
          %p319 = pneg %p68
        $region54: #{tpu_custom_call.1} parent=47 // pred_check_branch
          %321 = sbr.rel (%p319) target = $region56
        $region55: #{tpu_custom_call.1} parent=47 // pred_region
          %s322 = sand.u32 %s58, 1
          %s323 = scalar_lea.sflag [#allocation3], %s322
          %s324 = sand.u32 %s58, 1
          %s325 = smul.addr %s324, 128
          %s326 = scalar_lea.vmem [#allocation2], %s325
          %s328 = ssub.s32 2048, 2048
          %329 = vsyncadd %s323, %s328
          %s330 = smul.addr %s22, 16
          %s331 = smul.addr %s330, 128
          %s332 = scalar_lea.hbm %s1, %s331
          %s333 = sshll.u32 %s326, 4
          %s334 = int_to_ptr.vmem [resolvable:$true] %s333
          %339 = dma.hbm_to_vmem [thread:$0]  %s332, 2048, %s334, %s323, 256, 256, 16
        $region56: #{tpu_custom_call.1} parent=47 // pred_fallthru
          _
      $region48: #{tpu_custom_call.1} parent=5 // pred_fallthru
        _
      %p340 = scmp.le.s32.totalorder 1, %s22
      %p341 = scmp.lt.s32.totalorder %s22, 3
      %p342 = pnand %p340, %p341
      %p343 = pneg %p342
      // Predicated region
      $region57: #{tpu_custom_call.1} parent=5 // pred_check
        _
      $region58: #{tpu_custom_call.1} parent=5 // pred_check_branch
        %345 = sbr.rel (%p342) target = $region60
      $region59: #{tpu_custom_call.1} parent=5 // pred_region
        %s346 = ssub.s32 %s22, 1
        %s347 = sand.u32 %s61, 1
        %s348 = scalar_lea.sflag [#allocation3], %s347
        %s349 = sand.u32 %s61, 1
        %s350 = smul.addr %s349, 128
        %s351 = scalar_lea.vmem [#allocation2], %s350
        // Predicated region
        $region61: #{tpu_custom_call.1} parent=59 // pred_check
          %p352 = pneg %p74
        $region62: #{tpu_custom_call.1} parent=59 // pred_check_branch
          %354 = sbr.rel (%p352) target = $region64
        $region63: #{tpu_custom_call.1} parent=59 // pred_region
          %355 = dma.done %s348, 2048
        $region64: #{tpu_custom_call.1} parent=59 // pred_fallthru
          _
        %p356 = scmp.lt.s32.totalorder %s27, 1
        %s357 = scalar_select %p356, %s27, 1
        %s358 = smul.addr %s357, 16
        %s359 = smul.addr %s358, 8
        %s360 = scalar_lea.vmem %s0, %s359
        %p361 = pneg %p48
        %p362 = pneg %p45
        %s363 = sand.u32 %s61, 1
        %s364 = scalar_lea.sflag [#allocation3], %s363
        %s365 = sand.u32 %s61, 1
        %s366 = smul.addr %s365, 128
        %s367 = scalar_lea.vmem [#allocation2], %s366
        %p368 = pneg %p74
        %p369 = pneg %p71
        %p370 = pneg %p95
        %p371 = pneg %p92
        %p372 = pneg %p116
        %p373 = pneg %p113
        %p374 = pneg %p137
        %p375 = pneg %p134
        %p376 = pneg %p158
        %p377 = pneg %p155
        %p378 = pneg %p179
        %p379 = pneg %p176
        %p380 = pneg %p200
        %p381 = pneg %p197
        %p382 = pneg %p221
        %p383 = pneg %p218
        %p384 = pneg %p242
        %p385 = pneg %p239
        %p386 = pneg %p268
        %p387 = pneg %p265
        %s388 = sand.u32 %s255, 1
        %s389 = scalar_lea.sflag [#allocation4], %s388
        %s390 = sand.u32 %s255, 1
        %s391 = smul.addr %s390, 128
        %s392 = scalar_lea.vmem [#allocation5], %s391
        %p393 = scmp.lt.s32.totalorder %s27, 1
        %s394 = scalar_select %p393, %s27, 1
        %s395 = smul.addr %s394, 16
        %s396 = smul.addr %s395, 8
        %s397 = scalar_lea.vmem %s0, %s396
        %v398 = vld [vmem:[%s397] sm:$0xff]
        %v399 = vld [vmem:[%s397 + $0x8] sm:$0xff]
        %v400 = vld [vmem:[%s397 + $0x10] sm:$0xff]
        %v401 = vld [vmem:[%s397 + $0x18] sm:$0xff]
        %v402 = vld [vmem:[%s397 + $0x20] sm:$0xff]
        %v403 = vld [vmem:[%s397 + $0x28] sm:$0xff]
        %v404 = vld [vmem:[%s397 + $0x30] sm:$0xff]
        %v405 = vld [vmem:[%s397 + $0x38] sm:$0xff]
        %v406 = vld [vmem:[%s397 + $0x40] sm:$0xff]
        %v407 = vld [vmem:[%s397 + $0x48] sm:$0xff]
        %v408 = vld [vmem:[%s397 + $0x50] sm:$0xff]
        %v409 = vld [vmem:[%s397 + $0x58] sm:$0xff]
        %v410 = vld [vmem:[%s397 + $0x60] sm:$0xff]
        %v411 = vld [vmem:[%s397 + $0x68] sm:$0xff]
        %v412 = vld [vmem:[%s397 + $0x70] sm:$0xff]
        %v413 = vld [vmem:[%s397 + $0x78] sm:$0xff]
        %v414 = vld [vmem:[%s351] sm:$0xff]
        %v415 = vld [vmem:[%s351 + $0x8] sm:$0xff]
        %v416 = vld [vmem:[%s351 + $0x10] sm:$0xff]
        %v417 = vld [vmem:[%s351 + $0x18] sm:$0xff]
        %v418 = vld [vmem:[%s351 + $0x20] sm:$0xff]
        %v419 = vld [vmem:[%s351 + $0x28] sm:$0xff]
        %v420 = vld [vmem:[%s351 + $0x30] sm:$0xff]
        %v421 = vld [vmem:[%s351 + $0x38] sm:$0xff]
        %v422 = vld [vmem:[%s351 + $0x40] sm:$0xff]
        %v423 = vld [vmem:[%s351 + $0x48] sm:$0xff]
        %v424 = vld [vmem:[%s351 + $0x50] sm:$0xff]
        %v425 = vld [vmem:[%s351 + $0x58] sm:$0xff]
        %v426 = vld [vmem:[%s351 + $0x60] sm:$0xff]
        %v427 = vld [vmem:[%s351 + $0x68] sm:$0xff]
        %v428 = vld [vmem:[%s351 + $0x70] sm:$0xff]
        %v429 = vld [vmem:[%s351 + $0x78] sm:$0xff]
        %v430 = vadd.f32 %v398, %v414
        %v431 = vadd.f32 %v399, %v415
        %v432 = vadd.f32 %v400, %v416
        %v433 = vadd.f32 %v401, %v417
        %v434 = vadd.f32 %v402, %v418
        %v435 = vadd.f32 %v403, %v419
        %v436 = vadd.f32 %v404, %v420
        %v437 = vadd.f32 %v405, %v421
        %v438 = vadd.f32 %v406, %v422
        %v439 = vadd.f32 %v407, %v423
        %v440 = vadd.f32 %v408, %v424
        %v441 = vadd.f32 %v409, %v425
        %v442 = vadd.f32 %v410, %v426
        %v443 = vadd.f32 %v411, %v427
        %v444 = vadd.f32 %v412, %v428
        %v445 = vadd.f32 %v413, %v429
        %v446 = vld [vmem:[%s2] sm:$0xff]
        %v447 = vld [vmem:[%s2 + $0x8] sm:$0xff]
        %v448 = vld [vmem:[%s3] sm:$0xff]
        %v449 = vld [vmem:[%s3 + $0x8] sm:$0xff]
        %451 = vset.pattern.permute.xlu0 0
        %452 = vperm.xlu0 %451, %v448
        %v453 = vpop.permute.xlu0 %452
        %456 = vset.pattern.permute.xlu0 0
        %457 = vperm.xlu0 %456, %v449
        %v458 = vpop.permute.xlu0 %457
        %vm460 = vcmask 523264
        %v462 = vsel %vm460, %v446, 0
        %v465 = vsel %vm460, %v447, 0
        %467 = vmatprep.subr.mxu0 0.0
        %468 = vmatpush1.msra.mxu0 0.0
        %469 = vmatprep.subr.mxu0 0.0
        %470 = vmatpush1.msra.mxu0 0.0
        %471 = vmatprep.subr.mxu0 0.0
        %472 = vmatpush1.msra.mxu0 0.0
        %473 = vmatprep.subr.mxu0 0.0
        %474 = vmatpush1.msra.mxu0 0.0
        %475 = vmatprep.subr.mxu0 0.0
        %476 = vmatpush1.msra.mxu0 0.0
        %477 = vmatprep.subr.mxu0 0.0
        %478 = vmatpush1.msra.mxu0 0.0
        %479 = vmatprep.subr.mxu0 0.0
        %480 = vmatpush1.msra.mxu0 0.0
        %481 = vmatprep.subr.mxu0 0.0
        %482 = vmatpush1.msra.mxu0 0.0
        %483 = vmatprep.subr.mxu0 %v445
        %484 = vmatpush1.msra.mxu0 %v444
        %485 = vmatprep.subr.mxu0 %v443
        %486 = vmatpush1.msra.mxu0 %v442
        %487 = vmatprep.subr.mxu0 %v441
        %488 = vmatpush1.msra.mxu0 %v440
        %489 = vmatprep.subr.mxu0 %v439
        %490 = vmatpush1.msra.mxu0 %v438
        %491 = vmatprep.subr.mxu0 %v437
        %492 = vmatpush1.msra.mxu0 %v436
        %493 = vmatprep.subr.mxu0 %v435
        %494 = vmatpush1.msra.mxu0 %v434
        %495 = vmatprep.subr.mxu0 %v433
        %496 = vmatpush1.msra.mxu0 %v432
        %497 = vmatprep.subr.mxu0 %v431
        %498 = vmatpush1.msra.mxu0 %v430
        %499 = vmatprep.subr.mxu0 0.0
        %500 = vmatpush2.msra.mxu0 0.0
        %501 = vmatprep.subr.mxu0 0.0
        %502 = vmatpush2.msra.mxu0 0.0
        %503 = vmatprep.subr.mxu0 0.0
        %504 = vmatpush2.msra.mxu0 0.0
        %505 = vmatprep.subr.mxu0 0.0
        %506 = vmatpush2.msra.mxu0 0.0
        %507 = vmatprep.subr.mxu0 0.0
        %508 = vmatpush2.msra.mxu0 0.0
        %509 = vmatprep.subr.mxu0 0.0
        %510 = vmatpush2.msra.mxu0 0.0
        %511 = vmatprep.subr.mxu0 0.0
        %512 = vmatpush2.msra.mxu0 0.0
        %513 = vmatprep.subr.mxu0 0.0
        %514 = vmatpush2.msra.mxu0 0.0
        %515 = vmatprep.subr.mxu0 0.0
        %516 = vmatpush2.msra.mxu0 0.0
        %517 = vmatprep.subr.mxu0 0.0
        %518 = vmatpush2.msra.mxu0 0.0
        %519 = vmatprep.subr.mxu0 0.0
        %520 = vmatpush2.msra.mxu0 0.0
        %521 = vmatprep.subr.mxu0 0.0
        %522 = vmatpush2.msra.mxu0 0.0
        %523 = vmatprep.subr.mxu0 0.0
        %524 = vmatpush2.msra.mxu0 0.0
        %525 = vmatprep.subr.mxu0 0.0
        %526 = vmatpush2.msra.mxu0 0.0
        %527 = vmatprep.subr.mxu0 0.0
        %528 = vmatpush2.msra.mxu0 0.0
        %529 = vmatprep.subr.mxu0 0.0
        %530 = vmatpush2.msra.mxu0 0.0
        %531 = vmatprep.mubr.f32.mxu0 0.0
        %532 = vmatmul.mubr.f32.gmra.mxu0 %v462
        %v533 = vpop.f32.mrf.mxu0
        %v534 = vadd.f32 %v453, %v533
        %v535 = vpop.f32.mrf.mxu0
        %v536 = vadd.f32 %v453, %v535
        %537 = vmatprep.mubr.f32.mxu0 0.0
        %538 = vmatmul.mubr.f32.gmra.mxu0 %v465
        %v539 = vpop.f32.mrf.mxu0
        %v540 = vadd.f32 %v458, %v539
        %v541 = vpop.f32.mrf.mxu0
        %v542 = vadd.f32 %v458, %v541
        %543 = vdwg.mxu0
        %v544 = vmax.f32 %v534, 0.0
        %v545 = vmax.f32 %v536, 0.0
        %v546 = vmax.f32 %v540, 0.0
        %v547 = vmax.f32 %v542, 0.0
        %v548 = vld [vmem:[%s4] sm:$0xff]
        %v549 = vld [vmem:[%s4 + $0x8] sm:$0xff]
        %v550 = vld [vmem:[%s4 + $0x10] sm:$0xff]
        %v551 = vld [vmem:[%s4 + $0x18] sm:$0xff]
        %v552 = vld [vmem:[%s4 + $0x20] sm:$0xff]
        %v553 = vld [vmem:[%s4 + $0x28] sm:$0xff]
        %v554 = vld [vmem:[%s4 + $0x30] sm:$0xff]
        %v555 = vld [vmem:[%s4 + $0x38] sm:$0xff]
        %v556 = vld [vmem:[%s5] sm:$0xff]
        %v557 = vld [vmem:[%s5 + $0x8] sm:$0xff]
        %v558 = vld [vmem:[%s5 + $0x10] sm:$0xff]
        %v559 = vld [vmem:[%s5 + $0x18] sm:$0xff]
        %v560 = vld [vmem:[%s5 + $0x20] sm:$0xff]
        %v561 = vld [vmem:[%s5 + $0x28] sm:$0xff]
        %v562 = vld [vmem:[%s5 + $0x30] sm:$0xff]
        %v563 = vld [vmem:[%s5 + $0x38] sm:$0xff]
        %565 = vset.pattern.permute.xlu0 0
        %566 = vperm.xlu0 %565, %v556
        %v567 = vpop.permute.xlu0 %566
        %570 = vset.pattern.permute.xlu0 0
        %571 = vperm.xlu0 %570, %v557
        %v572 = vpop.permute.xlu0 %571
        %575 = vset.pattern.permute.xlu0 0
        %576 = vperm.xlu0 %575, %v558
        %v577 = vpop.permute.xlu0 %576
        %580 = vset.pattern.permute.xlu0 0
        %581 = vperm.xlu0 %580, %v559
        %v582 = vpop.permute.xlu0 %581
        %585 = vset.pattern.permute.xlu0 0
        %586 = vperm.xlu0 %585, %v560
        %v587 = vpop.permute.xlu0 %586
        %590 = vset.pattern.permute.xlu0 0
        %591 = vperm.xlu0 %590, %v561
        %v592 = vpop.permute.xlu0 %591
        %595 = vset.pattern.permute.xlu0 0
        %596 = vperm.xlu0 %595, %v562
        %v597 = vpop.permute.xlu0 %596
        %600 = vset.pattern.permute.xlu0 0
        %601 = vperm.xlu0 %600, %v563
        %v602 = vpop.permute.xlu0 %601
        %vm604 = vcmask 130048
        %v606 = vsel %vm604, %v548, 0
        %v609 = vsel %vm604, %v549, 0
        %v612 = vsel %vm604, %v550, 0
        %v615 = vsel %vm604, %v551, 0
        %v618 = vsel %vm604, %v552, 0
        %v621 = vsel %vm604, %v553, 0
        %v624 = vsel %vm604, %v554, 0
        %v627 = vsel %vm604, %v555, 0
        %629 = vmatprep.subr.mxu0 0.0
        %630 = vmatpush1.msra.mxu0 0.0
        %631 = vmatprep.subr.mxu0 0.0
        %632 = vmatpush1.msra.mxu0 0.0
        %633 = vmatprep.subr.mxu0 0.0
        %634 = vmatpush1.msra.mxu0 0.0
        %635 = vmatprep.subr.mxu0 0.0
        %636 = vmatpush1.msra.mxu0 0.0
        %637 = vmatprep.subr.mxu0 0.0
        %638 = vmatpush1.msra.mxu0 0.0
        %639 = vmatprep.subr.mxu0 0.0
        %640 = vmatpush1.msra.mxu0 0.0
        %641 = vmatprep.subr.mxu0 0.0
        %642 = vmatpush1.msra.mxu0 0.0
        %643 = vmatprep.subr.mxu0 0.0
        %644 = vmatpush1.msra.mxu0 0.0
        %645 = vmatprep.subr.mxu0 0.0
        %646 = vmatpush1.msra.mxu0 0.0
        %647 = vmatprep.subr.mxu0 0.0
        %648 = vmatpush1.msra.mxu0 0.0
        %649 = vmatprep.subr.mxu0 0.0
        %650 = vmatpush1.msra.mxu0 0.0
        %651 = vmatprep.subr.mxu0 0.0
        %652 = vmatpush1.msra.mxu0 0.0
        %653 = vmatprep.subr.mxu0 0.0
        %654 = vmatpush1.msra.mxu0 0.0
        %655 = vmatprep.subr.mxu0 0.0
        %656 = vmatpush1.msra.mxu0 0.0
        %657 = vmatprep.subr.mxu0 %v547
        %658 = vmatpush1.msra.mxu0 %v546
        %659 = vmatprep.subr.mxu0 %v545
        %660 = vmatpush1.msra.mxu0 %v544
        %661 = vmatprep.subr.mxu0 0.0
        %662 = vmatpush2.msra.mxu0 0.0
        %663 = vmatprep.subr.mxu0 0.0
        %664 = vmatpush2.msra.mxu0 0.0
        %665 = vmatprep.subr.mxu0 0.0
        %666 = vmatpush2.msra.mxu0 0.0
        %667 = vmatprep.subr.mxu0 0.0
        %668 = vmatpush2.msra.mxu0 0.0
        %669 = vmatprep.subr.mxu0 0.0
        %670 = vmatpush2.msra.mxu0 0.0
        %671 = vmatprep.subr.mxu0 0.0
        %672 = vmatpush2.msra.mxu0 0.0
        %673 = vmatprep.subr.mxu0 0.0
        %674 = vmatpush2.msra.mxu0 0.0
        %675 = vmatprep.subr.mxu0 0.0
        %676 = vmatpush2.msra.mxu0 0.0
        %677 = vmatprep.subr.mxu0 0.0
        %678 = vmatpush2.msra.mxu0 0.0
        %679 = vmatprep.subr.mxu0 0.0
        %680 = vmatpush2.msra.mxu0 0.0
        %681 = vmatprep.subr.mxu0 0.0
        %682 = vmatpush2.msra.mxu0 0.0
        %683 = vmatprep.subr.mxu0 0.0
        %684 = vmatpush2.msra.mxu0 0.0
        %685 = vmatprep.subr.mxu0 0.0
        %686 = vmatpush2.msra.mxu0 0.0
        %687 = vmatprep.subr.mxu0 0.0
        %688 = vmatpush2.msra.mxu0 0.0
        %689 = vmatprep.subr.mxu0 0.0
        %690 = vmatpush2.msra.mxu0 0.0
        %691 = vmatprep.subr.mxu0 0.0
        %692 = vmatpush2.msra.mxu0 0.0
        %693 = vmatprep.mubr.f32.mxu0 0.0
        %694 = vmatmul.mubr.f32.gmra.mxu0 %v606
        %v695 = vpop.f32.mrf.mxu0
        %v696 = vadd.f32 %v567, %v695
        %v697 = vpop.f32.mrf.mxu0
        %v698 = vadd.f32 %v567, %v697
        %699 = vmatprep.mubr.f32.mxu0 0.0
        %700 = vmatmul.mubr.f32.gmra.mxu0 %v609
        %v701 = vpop.f32.mrf.mxu0
        %v702 = vadd.f32 %v572, %v701
        %v703 = vpop.f32.mrf.mxu0
        %v704 = vadd.f32 %v572, %v703
        %705 = vmatprep.mubr.f32.mxu0 0.0
        %706 = vmatmul.mubr.f32.gmra.mxu0 %v612
        %v707 = vpop.f32.mrf.mxu0
        %v708 = vadd.f32 %v577, %v707
        %v709 = vpop.f32.mrf.mxu0
        %v710 = vadd.f32 %v577, %v709
        %711 = vmatprep.mubr.f32.mxu0 0.0
        %712 = vmatmul.mubr.f32.gmra.mxu0 %v615
        %v713 = vpop.f32.mrf.mxu0
        %v714 = vadd.f32 %v582, %v713
        %v715 = vpop.f32.mrf.mxu0
        %v716 = vadd.f32 %v582, %v715
        %717 = vmatprep.mubr.f32.mxu0 0.0
        %718 = vmatmul.mubr.f32.gmra.mxu0 %v618
        %v719 = vpop.f32.mrf.mxu0
        %v720 = vadd.f32 %v587, %v719
        %v721 = vpop.f32.mrf.mxu0
        %v722 = vadd.f32 %v587, %v721
        %723 = vmatprep.mubr.f32.mxu0 0.0
        %724 = vmatmul.mubr.f32.gmra.mxu0 %v621
        %v725 = vpop.f32.mrf.mxu0
        %v726 = vadd.f32 %v592, %v725
        %v727 = vpop.f32.mrf.mxu0
        %v728 = vadd.f32 %v592, %v727
        %729 = vmatprep.mubr.f32.mxu0 0.0
        %730 = vmatmul.mubr.f32.gmra.mxu0 %v624
        %v731 = vpop.f32.mrf.mxu0
        %v732 = vadd.f32 %v597, %v731
        %v733 = vpop.f32.mrf.mxu0
        %v734 = vadd.f32 %v597, %v733
        %735 = vmatprep.mubr.f32.mxu0 0.0
        %736 = vmatmul.mubr.f32.gmra.mxu0 %v627
        %v737 = vpop.f32.mrf.mxu0
        %v738 = vadd.f32 %v602, %v737
        %v739 = vpop.f32.mrf.mxu0
        %v740 = vadd.f32 %v602, %v739
        %741 = vdwg.mxu0
        %v742 = vadd.f32 %v430, %v431
        %743 = vadd.xlane.f32.xlu0 %v742
        %v744 = vpop.xlane.xlu0 %743
        %v745 = vadd.f32 %v432, %v433
        %746 = vadd.xlane.f32.xlu0 %v745
        %v747 = vpop.xlane.xlu0 %746
        %v748 = vadd.f32 %v434, %v435
        %749 = vadd.xlane.f32.xlu0 %v748
        %v750 = vpop.xlane.xlu0 %749
        %v751 = vadd.f32 %v436, %v437
        %752 = vadd.xlane.f32.xlu0 %v751
        %v753 = vpop.xlane.xlu0 %752
        %v754 = vadd.f32 %v438, %v439
        %755 = vadd.xlane.f32.xlu0 %v754
        %v756 = vpop.xlane.xlu0 %755
        %v757 = vadd.f32 %v440, %v441
        %758 = vadd.xlane.f32.xlu0 %v757
        %v759 = vpop.xlane.xlu0 %758
        %v760 = vadd.f32 %v442, %v443
        %761 = vadd.xlane.f32.xlu0 %v760
        %v762 = vpop.xlane.xlu0 %761
        %v763 = vadd.f32 %v444, %v445
        %764 = vadd.xlane.f32.xlu0 %v763
        %v765 = vpop.xlane.xlu0 %764
        %v766 = vrcp.pop 256.0
        %v767 = vmul.f32 %v744, %v766
        %v768 = vmul.f32 %v747, %v766
        %v769 = vmul.f32 %v750, %v766
        %v770 = vmul.f32 %v753, %v766
        %v771 = vmul.f32 %v756, %v766
        %v772 = vmul.f32 %v759, %v766
        %v773 = vmul.f32 %v762, %v766
        %v774 = vmul.f32 %v765, %v766
        %v775 = vld [vmem:[%s6] sm:$0xff]
        %v776 = vld [vmem:[%s6 + $0x8] sm:$0xff]
        %v777 = vld [vmem:[%s7] sm:$0xff]
        %v778 = vld [vmem:[%s7 + $0x8] sm:$0xff]
        %780 = vset.pattern.permute.xlu0 0
        %781 = vperm.xlu0 %780, %v777
        %v782 = vpop.permute.xlu0 %781
        %785 = vset.pattern.permute.xlu0 0
        %786 = vperm.xlu0 %785, %v778
        %v787 = vpop.permute.xlu0 %786
        %v790 = vsel %vm460, %v775, 0
        %v793 = vsel %vm460, %v776, 0
        %795 = vmatprep.subr.mxu0 0.0
        %796 = vmatpush1.msra.mxu0 0.0
        %797 = vmatprep.subr.mxu0 0.0
        %798 = vmatpush1.msra.mxu0 0.0
        %799 = vmatprep.subr.mxu0 0.0
        %800 = vmatpush1.msra.mxu0 0.0
        %801 = vmatprep.subr.mxu0 0.0
        %802 = vmatpush1.msra.mxu0 0.0
        %803 = vmatprep.subr.mxu0 0.0
        %804 = vmatpush1.msra.mxu0 0.0
        %805 = vmatprep.subr.mxu0 0.0
        %806 = vmatpush1.msra.mxu0 0.0
        %807 = vmatprep.subr.mxu0 0.0
        %808 = vmatpush1.msra.mxu0 0.0
        %809 = vmatprep.subr.mxu0 0.0
        %810 = vmatpush1.msra.mxu0 0.0
        %811 = vmatprep.subr.mxu0 0.0
        %812 = vmatpush1.msra.mxu0 %v774
        %813 = vmatprep.subr.mxu0 0.0
        %814 = vmatpush1.msra.mxu0 %v773
        %815 = vmatprep.subr.mxu0 0.0
        %816 = vmatpush1.msra.mxu0 %v772
        %817 = vmatprep.subr.mxu0 0.0
        %818 = vmatpush1.msra.mxu0 %v771
        %819 = vmatprep.subr.mxu0 0.0
        %820 = vmatpush1.msra.mxu0 %v770
        %821 = vmatprep.subr.mxu0 0.0
        %822 = vmatpush1.msra.mxu0 %v769
        %823 = vmatprep.subr.mxu0 0.0
        %824 = vmatpush1.msra.mxu0 %v768
        %825 = vmatprep.subr.mxu0 0.0
        %826 = vmatpush1.msra.mxu0 %v767
        %827 = vmatprep.subr.mxu0 0.0
        %828 = vmatpush2.msra.mxu0 0.0
        %829 = vmatprep.subr.mxu0 0.0
        %830 = vmatpush2.msra.mxu0 0.0
        %831 = vmatprep.subr.mxu0 0.0
        %832 = vmatpush2.msra.mxu0 0.0
        %833 = vmatprep.subr.mxu0 0.0
        %834 = vmatpush2.msra.mxu0 0.0
        %835 = vmatprep.subr.mxu0 0.0
        %836 = vmatpush2.msra.mxu0 0.0
        %837 = vmatprep.subr.mxu0 0.0
        %838 = vmatpush2.msra.mxu0 0.0
        %839 = vmatprep.subr.mxu0 0.0
        %840 = vmatpush2.msra.mxu0 0.0
        %841 = vmatprep.subr.mxu0 0.0
        %842 = vmatpush2.msra.mxu0 0.0
        %843 = vmatprep.subr.mxu0 0.0
        %844 = vmatpush2.msra.mxu0 0.0
        %845 = vmatprep.subr.mxu0 0.0
        %846 = vmatpush2.msra.mxu0 0.0
        %847 = vmatprep.subr.mxu0 0.0
        %848 = vmatpush2.msra.mxu0 0.0
        %849 = vmatprep.subr.mxu0 0.0
        %850 = vmatpush2.msra.mxu0 0.0
        %851 = vmatprep.subr.mxu0 0.0
        %852 = vmatpush2.msra.mxu0 0.0
        %853 = vmatprep.subr.mxu0 0.0
        %854 = vmatpush2.msra.mxu0 0.0
        %855 = vmatprep.subr.mxu0 0.0
        %856 = vmatpush2.msra.mxu0 0.0
        %857 = vmatprep.subr.mxu0 0.0
        %858 = vmatpush2.msra.mxu0 0.0
        %859 = vmatprep.mubr.f32.mxu0 0.0
        %860 = vmatmul.mubr.f32.gmra.mxu0 %v790
        %v861 = vpop.f32.mrf.mxu0
        %v862 = vadd.f32 %v782, %v861
        %v863 = vpop.f32.mrf.mxu0
        %864 = vmatprep.mubr.f32.mxu0 0.0
        %865 = vmatmul.mubr.f32.gmra.mxu0 %v793
        %v866 = vpop.f32.mrf.mxu0
        %v867 = vadd.f32 %v787, %v866
        %v868 = vpop.f32.mrf.mxu0
        %869 = vdwg.mxu0
        %v870 = vmax.f32 %v862, 0.0
        %v871 = vmax.f32 %v867, 0.0
        %v872 = vld [vmem:[%s8] sm:$0xff]
        %v873 = vld [vmem:[%s8 + $0x8] sm:$0xff]
        %v874 = vld [vmem:[%s8 + $0x10] sm:$0xff]
        %v875 = vld [vmem:[%s8 + $0x18] sm:$0xff]
        %v876 = vld [vmem:[%s8 + $0x20] sm:$0xff]
        %v877 = vld [vmem:[%s8 + $0x28] sm:$0xff]
        %v878 = vld [vmem:[%s8 + $0x30] sm:$0xff]
        %v879 = vld [vmem:[%s8 + $0x38] sm:$0xff]
        %v880 = vld [vmem:[%s9] sm:$0xff]
        %v881 = vld [vmem:[%s9 + $0x8] sm:$0xff]
        %v882 = vld [vmem:[%s9 + $0x10] sm:$0xff]
        %v883 = vld [vmem:[%s9 + $0x18] sm:$0xff]
        %v884 = vld [vmem:[%s9 + $0x20] sm:$0xff]
        %v885 = vld [vmem:[%s9 + $0x28] sm:$0xff]
        %v886 = vld [vmem:[%s9 + $0x30] sm:$0xff]
        %v887 = vld [vmem:[%s9 + $0x38] sm:$0xff]
        %889 = vset.pattern.permute.xlu0 0
        %890 = vperm.xlu0 %889, %v880
        %v891 = vpop.permute.xlu0 %890
        %894 = vset.pattern.permute.xlu0 0
        %895 = vperm.xlu0 %894, %v881
        %v896 = vpop.permute.xlu0 %895
        %899 = vset.pattern.permute.xlu0 0
        %900 = vperm.xlu0 %899, %v882
        %v901 = vpop.permute.xlu0 %900
        %904 = vset.pattern.permute.xlu0 0
        %905 = vperm.xlu0 %904, %v883
        %v906 = vpop.permute.xlu0 %905
        %909 = vset.pattern.permute.xlu0 0
        %910 = vperm.xlu0 %909, %v884
        %v911 = vpop.permute.xlu0 %910
        %914 = vset.pattern.permute.xlu0 0
        %915 = vperm.xlu0 %914, %v885
        %v916 = vpop.permute.xlu0 %915
        %919 = vset.pattern.permute.xlu0 0
        %920 = vperm.xlu0 %919, %v886
        %v921 = vpop.permute.xlu0 %920
        %924 = vset.pattern.permute.xlu0 0
        %925 = vperm.xlu0 %924, %v887
        %v926 = vpop.permute.xlu0 %925
        %v929 = vsel %vm604, %v872, 0
        %v932 = vsel %vm604, %v873, 0
        %v935 = vsel %vm604, %v874, 0
        %v938 = vsel %vm604, %v875, 0
        %v941 = vsel %vm604, %v876, 0
        %v944 = vsel %vm604, %v877, 0
        %v947 = vsel %vm604, %v878, 0
        %v950 = vsel %vm604, %v879, 0
        %952 = vmatprep.subr.mxu0 0.0
        %953 = vmatpush1.msra.mxu0 0.0
        %954 = vmatprep.subr.mxu0 0.0
        %955 = vmatpush1.msra.mxu0 0.0
        %956 = vmatprep.subr.mxu0 0.0
        %957 = vmatpush1.msra.mxu0 0.0
        %958 = vmatprep.subr.mxu0 0.0
        %959 = vmatpush1.msra.mxu0 0.0
        %960 = vmatprep.subr.mxu0 0.0
        %961 = vmatpush1.msra.mxu0 0.0
        %962 = vmatprep.subr.mxu0 0.0
        %963 = vmatpush1.msra.mxu0 0.0
        %964 = vmatprep.subr.mxu0 0.0
        %965 = vmatpush1.msra.mxu0 0.0
        %966 = vmatprep.subr.mxu0 0.0
        %967 = vmatpush1.msra.mxu0 0.0
        %968 = vmatprep.subr.mxu0 0.0
        %969 = vmatpush1.msra.mxu0 0.0
        %970 = vmatprep.subr.mxu0 0.0
        %971 = vmatpush1.msra.mxu0 0.0
        %972 = vmatprep.subr.mxu0 0.0
        %973 = vmatpush1.msra.mxu0 0.0
        %974 = vmatprep.subr.mxu0 0.0
        %975 = vmatpush1.msra.mxu0 0.0
        %976 = vmatprep.subr.mxu0 0.0
        %977 = vmatpush1.msra.mxu0 0.0
        %978 = vmatprep.subr.mxu0 0.0
        %979 = vmatpush1.msra.mxu0 0.0
        %980 = vmatprep.subr.mxu0 0.0
        %981 = vmatpush1.msra.mxu0 %v871
        %982 = vmatprep.subr.mxu0 0.0
        %983 = vmatpush1.msra.mxu0 %v870
        %984 = vmatprep.subr.mxu0 0.0
        %985 = vmatpush2.msra.mxu0 0.0
        %986 = vmatprep.subr.mxu0 0.0
        %987 = vmatpush2.msra.mxu0 0.0
        %988 = vmatprep.subr.mxu0 0.0
        %989 = vmatpush2.msra.mxu0 0.0
        %990 = vmatprep.subr.mxu0 0.0
        %991 = vmatpush2.msra.mxu0 0.0
        %992 = vmatprep.subr.mxu0 0.0
        %993 = vmatpush2.msra.mxu0 0.0
        %994 = vmatprep.subr.mxu0 0.0
        %995 = vmatpush2.msra.mxu0 0.0
        %996 = vmatprep.subr.mxu0 0.0
        %997 = vmatpush2.msra.mxu0 0.0
        %998 = vmatprep.subr.mxu0 0.0
        %999 = vmatpush2.msra.mxu0 0.0
        %1000 = vmatprep.subr.mxu0 0.0
        %1001 = vmatpush2.msra.mxu0 0.0
        %1002 = vmatprep.subr.mxu0 0.0
        %1003 = vmatpush2.msra.mxu0 0.0
        %1004 = vmatprep.subr.mxu0 0.0
        %1005 = vmatpush2.msra.mxu0 0.0
        %1006 = vmatprep.subr.mxu0 0.0
        %1007 = vmatpush2.msra.mxu0 0.0
        %1008 = vmatprep.subr.mxu0 0.0
        %1009 = vmatpush2.msra.mxu0 0.0
        %1010 = vmatprep.subr.mxu0 0.0
        %1011 = vmatpush2.msra.mxu0 0.0
        %1012 = vmatprep.subr.mxu0 0.0
        %1013 = vmatpush2.msra.mxu0 0.0
        %1014 = vmatprep.subr.mxu0 0.0
        %1015 = vmatpush2.msra.mxu0 0.0
        %1016 = vmatprep.mubr.f32.mxu0 0.0
        %1017 = vmatmul.mubr.f32.gmra.mxu0 %v929
        %v1018 = vpop.f32.mrf.mxu0
        %v1019 = vadd.f32 %v891, %v1018
        %v1020 = vpop.f32.mrf.mxu0
        %1021 = vmatprep.mubr.f32.mxu0 0.0
        %1022 = vmatmul.mubr.f32.gmra.mxu0 %v932
        %v1023 = vpop.f32.mrf.mxu0
        %v1024 = vadd.f32 %v896, %v1023
        %v1025 = vpop.f32.mrf.mxu0
        %1026 = vmatprep.mubr.f32.mxu0 0.0
        %1027 = vmatmul.mubr.f32.gmra.mxu0 %v935
        %v1028 = vpop.f32.mrf.mxu0
        %v1029 = vadd.f32 %v901, %v1028
        %v1030 = vpop.f32.mrf.mxu0
        %1031 = vmatprep.mubr.f32.mxu0 0.0
        %1032 = vmatmul.mubr.f32.gmra.mxu0 %v938
        %v1033 = vpop.f32.mrf.mxu0
        %v1034 = vadd.f32 %v906, %v1033
        %v1035 = vpop.f32.mrf.mxu0
        %1036 = vmatprep.mubr.f32.mxu0 0.0
        %1037 = vmatmul.mubr.f32.gmra.mxu0 %v941
        %v1038 = vpop.f32.mrf.mxu0
        %v1039 = vadd.f32 %v911, %v1038
        %v1040 = vpop.f32.mrf.mxu0
        %1041 = vmatprep.mubr.f32.mxu0 0.0
        %1042 = vmatmul.mubr.f32.gmra.mxu0 %v944
        %v1043 = vpop.f32.mrf.mxu0
        %v1044 = vadd.f32 %v916, %v1043
        %v1045 = vpop.f32.mrf.mxu0
        %1046 = vmatprep.mubr.f32.mxu0 0.0
        %1047 = vmatmul.mubr.f32.gmra.mxu0 %v947
        %v1048 = vpop.f32.mrf.mxu0
        %v1049 = vadd.f32 %v921, %v1048
        %v1050 = vpop.f32.mrf.mxu0
        %1051 = vmatprep.mubr.f32.mxu0 0.0
        %1052 = vmatmul.mubr.f32.gmra.mxu0 %v950
        %v1053 = vpop.f32.mrf.mxu0
        %v1054 = vadd.f32 %v926, %v1053
        %v1055 = vpop.f32.mrf.mxu0
        %1056 = vdwg.mxu0
        %1058 = vset.pattern.permute.xlu0 0
        %1059 = vperm.xlu0 %1058, %v1019
        %v1060 = vpop.permute.xlu0 %1059
        %1063 = vset.pattern.permute.xlu0 0
        %1064 = vperm.xlu0 %1063, %v1024
        %v1065 = vpop.permute.xlu0 %1064
        %1068 = vset.pattern.permute.xlu0 0
        %1069 = vperm.xlu0 %1068, %v1029
        %v1070 = vpop.permute.xlu0 %1069
        %1073 = vset.pattern.permute.xlu0 0
        %1074 = vperm.xlu0 %1073, %v1034
        %v1075 = vpop.permute.xlu0 %1074
        %1078 = vset.pattern.permute.xlu0 0
        %1079 = vperm.xlu0 %1078, %v1039
        %v1080 = vpop.permute.xlu0 %1079
        %1083 = vset.pattern.permute.xlu0 0
        %1084 = vperm.xlu0 %1083, %v1044
        %v1085 = vpop.permute.xlu0 %1084
        %1088 = vset.pattern.permute.xlu0 0
        %1089 = vperm.xlu0 %1088, %v1049
        %v1090 = vpop.permute.xlu0 %1089
        %1093 = vset.pattern.permute.xlu0 0
        %1094 = vperm.xlu0 %1093, %v1054
        %v1095 = vpop.permute.xlu0 %1094
        %v1097 = vadd.f32 %v696, %v1060
        %v1098 = vadd.f32 %v698, %v1060
        %v1099 = vadd.f32 %v702, %v1065
        %v1100 = vadd.f32 %v704, %v1065
        %v1101 = vadd.f32 %v708, %v1070
        %v1102 = vadd.f32 %v710, %v1070
        %v1103 = vadd.f32 %v714, %v1075
        %v1104 = vadd.f32 %v716, %v1075
        %v1105 = vadd.f32 %v720, %v1080
        %v1106 = vadd.f32 %v722, %v1080
        %v1107 = vadd.f32 %v726, %v1085
        %v1108 = vadd.f32 %v728, %v1085
        %v1109 = vadd.f32 %v732, %v1090
        %v1110 = vadd.f32 %v734, %v1090
        %v1111 = vadd.f32 %v738, %v1095
        %v1112 = vadd.f32 %v740, %v1095
        %v1113 = vxor.u32 %v1097, 2147483648
        %v1114 = vxor.u32 %v1098, 2147483648
        %v1115 = vxor.u32 %v1099, 2147483648
        %v1116 = vxor.u32 %v1100, 2147483648
        %v1117 = vxor.u32 %v1101, 2147483648
        %v1118 = vxor.u32 %v1102, 2147483648
        %v1119 = vxor.u32 %v1103, 2147483648
        %v1120 = vxor.u32 %v1104, 2147483648
        %v1121 = vxor.u32 %v1105, 2147483648
        %v1122 = vxor.u32 %v1106, 2147483648
        %v1123 = vxor.u32 %v1107, 2147483648
        %v1124 = vxor.u32 %v1108, 2147483648
        %v1125 = vxor.u32 %v1109, 2147483648
        %v1126 = vxor.u32 %v1110, 2147483648
        %v1127 = vxor.u32 %v1111, 2147483648
        %v1128 = vxor.u32 %v1112, 2147483648
        %v1129 = vmul.f32 %v1113, 1.442695
        %v1130 = vpow.pop %v1129
        %v1131 = vmul.f32 %v1114, 1.442695
        %v1132 = vpow.pop %v1131
        %v1133 = vmul.f32 %v1115, 1.442695
        %v1134 = vpow.pop %v1133
        %v1135 = vmul.f32 %v1116, 1.442695
        %v1136 = vpow.pop %v1135
        %v1137 = vmul.f32 %v1117, 1.442695
        %v1138 = vpow.pop %v1137
        %v1139 = vmul.f32 %v1118, 1.442695
        %v1140 = vpow.pop %v1139
        %v1141 = vmul.f32 %v1119, 1.442695
        %v1142 = vpow.pop %v1141
        %v1143 = vmul.f32 %v1120, 1.442695
        %v1144 = vpow.pop %v1143
        %v1145 = vmul.f32 %v1121, 1.442695
        %v1146 = vpow.pop %v1145
        %v1147 = vmul.f32 %v1122, 1.442695
        %v1148 = vpow.pop %v1147
        %v1149 = vmul.f32 %v1123, 1.442695
        %v1150 = vpow.pop %v1149
        %v1151 = vmul.f32 %v1124, 1.442695
        %v1152 = vpow.pop %v1151
        %v1153 = vmul.f32 %v1125, 1.442695
        %v1154 = vpow.pop %v1153
        %v1155 = vmul.f32 %v1126, 1.442695
        %v1156 = vpow.pop %v1155
        %v1157 = vmul.f32 %v1127, 1.442695
        %v1158 = vpow.pop %v1157
        %v1159 = vmul.f32 %v1128, 1.442695
        %v1160 = vpow.pop %v1159
        %v1161 = vadd.f32 %v1130, 1.0
        %v1162 = vadd.f32 %v1132, 1.0
        %v1163 = vadd.f32 %v1134, 1.0
        %v1164 = vadd.f32 %v1136, 1.0
        %v1165 = vadd.f32 %v1138, 1.0
        %v1166 = vadd.f32 %v1140, 1.0
        %v1167 = vadd.f32 %v1142, 1.0
        %v1168 = vadd.f32 %v1144, 1.0
        %v1169 = vadd.f32 %v1146, 1.0
        %v1170 = vadd.f32 %v1148, 1.0
        %v1171 = vadd.f32 %v1150, 1.0
        %v1172 = vadd.f32 %v1152, 1.0
        %v1173 = vadd.f32 %v1154, 1.0
        %v1174 = vadd.f32 %v1156, 1.0
        %v1175 = vadd.f32 %v1158, 1.0
        %v1176 = vadd.f32 %v1160, 1.0
        %v1177 = vrcp.pop %v1161
        %v1178 = vmul.f32 1.0, %v1177
        %v1179 = vrcp.pop %v1162
        %v1180 = vmul.f32 1.0, %v1179
        %v1181 = vrcp.pop %v1163
        %v1182 = vmul.f32 1.0, %v1181
        %v1183 = vrcp.pop %v1164
        %v1184 = vmul.f32 1.0, %v1183
        %v1185 = vrcp.pop %v1165
        %v1186 = vmul.f32 1.0, %v1185
        %v1187 = vrcp.pop %v1166
        %v1188 = vmul.f32 1.0, %v1187
        %v1189 = vrcp.pop %v1167
        %v1190 = vmul.f32 1.0, %v1189
        %v1191 = vrcp.pop %v1168
        %v1192 = vmul.f32 1.0, %v1191
        %v1193 = vrcp.pop %v1169
        %v1194 = vmul.f32 1.0, %v1193
        %v1195 = vrcp.pop %v1170
        %v1196 = vmul.f32 1.0, %v1195
        %v1197 = vrcp.pop %v1171
        %v1198 = vmul.f32 1.0, %v1197
        %v1199 = vrcp.pop %v1172
        %v1200 = vmul.f32 1.0, %v1199
        %v1201 = vrcp.pop %v1173
        %v1202 = vmul.f32 1.0, %v1201
        %v1203 = vrcp.pop %v1174
        %v1204 = vmul.f32 1.0, %v1203
        %v1205 = vrcp.pop %v1175
        %v1206 = vmul.f32 1.0, %v1205
        %v1207 = vrcp.pop %v1176
        %v1208 = vmul.f32 1.0, %v1207
        %v1209 = vsub.f32 %v398, %v414
        %v1210 = vsub.f32 %v399, %v415
        %v1211 = vsub.f32 %v400, %v416
        %v1212 = vsub.f32 %v401, %v417
        %v1213 = vsub.f32 %v402, %v418
        %v1214 = vsub.f32 %v403, %v419
        %v1215 = vsub.f32 %v404, %v420
        %v1216 = vsub.f32 %v405, %v421
        %v1217 = vsub.f32 %v406, %v422
        %v1218 = vsub.f32 %v407, %v423
        %v1219 = vsub.f32 %v408, %v424
        %v1220 = vsub.f32 %v409, %v425
        %v1221 = vsub.f32 %v410, %v426
        %v1222 = vsub.f32 %v411, %v427
        %v1223 = vsub.f32 %v412, %v428
        %v1224 = vsub.f32 %v413, %v429
        %v1225 = vmul.f32 %v1209, %v1178
        %v1226 = vmul.f32 %v1210, %v1180
        %v1227 = vmul.f32 %v1211, %v1182
        %v1228 = vmul.f32 %v1212, %v1184
        %v1229 = vmul.f32 %v1213, %v1186
        %v1230 = vmul.f32 %v1214, %v1188
        %v1231 = vmul.f32 %v1215, %v1190
        %v1232 = vmul.f32 %v1216, %v1192
        %v1233 = vmul.f32 %v1217, %v1194
        %v1234 = vmul.f32 %v1218, %v1196
        %v1235 = vmul.f32 %v1219, %v1198
        %v1236 = vmul.f32 %v1220, %v1200
        %v1237 = vmul.f32 %v1221, %v1202
        %v1238 = vmul.f32 %v1222, %v1204
        %v1239 = vmul.f32 %v1223, %v1206
        %v1240 = vmul.f32 %v1224, %v1208
        %v1241 = vadd.f32 %v414, %v1225
        %v1242 = vadd.f32 %v415, %v1226
        %v1243 = vadd.f32 %v416, %v1227
        %v1244 = vadd.f32 %v417, %v1228
        %v1245 = vadd.f32 %v418, %v1229
        %v1246 = vadd.f32 %v419, %v1230
        %v1247 = vadd.f32 %v420, %v1231
        %v1248 = vadd.f32 %v421, %v1232
        %v1249 = vadd.f32 %v422, %v1233
        %v1250 = vadd.f32 %v423, %v1234
        %v1251 = vadd.f32 %v424, %v1235
        %v1252 = vadd.f32 %v425, %v1236
        %v1253 = vadd.f32 %v426, %v1237
        %v1254 = vadd.f32 %v427, %v1238
        %v1255 = vadd.f32 %v428, %v1239
        %v1256 = vadd.f32 %v429, %v1240
        %v1257 = vmul.f32 %v1241, 2.0
        %v1258 = vmul.f32 %v1242, 2.0
        %v1259 = vmul.f32 %v1243, 2.0
        %v1260 = vmul.f32 %v1244, 2.0
        %v1261 = vmul.f32 %v1245, 2.0
        %v1262 = vmul.f32 %v1246, 2.0
        %v1263 = vmul.f32 %v1247, 2.0
        %v1264 = vmul.f32 %v1248, 2.0
        %v1265 = vmul.f32 %v1249, 2.0
        %v1266 = vmul.f32 %v1250, 2.0
        %v1267 = vmul.f32 %v1251, 2.0
        %v1268 = vmul.f32 %v1252, 2.0
        %v1269 = vmul.f32 %v1253, 2.0
        %v1270 = vmul.f32 %v1254, 2.0
        %v1271 = vmul.f32 %v1255, 2.0
        %v1272 = vmul.f32 %v1256, 2.0
        %1273 = vst [vmem:[%s392] sm:$0xff] %v1257
        %1274 = vst [vmem:[%s392 + $0x8] sm:$0xff] %v1258
        %1275 = vst [vmem:[%s392 + $0x10] sm:$0xff] %v1259
        %1276 = vst [vmem:[%s392 + $0x18] sm:$0xff] %v1260
        %1277 = vst [vmem:[%s392 + $0x20] sm:$0xff] %v1261
        %1278 = vst [vmem:[%s392 + $0x28] sm:$0xff] %v1262
        %1279 = vst [vmem:[%s392 + $0x30] sm:$0xff] %v1263
        %1280 = vst [vmem:[%s392 + $0x38] sm:$0xff] %v1264
        %1281 = vst [vmem:[%s392 + $0x40] sm:$0xff] %v1265
        %1282 = vst [vmem:[%s392 + $0x48] sm:$0xff] %v1266
        %1283 = vst [vmem:[%s392 + $0x50] sm:$0xff] %v1267
        %1284 = vst [vmem:[%s392 + $0x58] sm:$0xff] %v1268
        %1285 = vst [vmem:[%s392 + $0x60] sm:$0xff] %v1269
        %1286 = vst [vmem:[%s392 + $0x68] sm:$0xff] %v1270
        %1287 = vst [vmem:[%s392 + $0x70] sm:$0xff] %v1271
        %1288 = vst [vmem:[%s392 + $0x78] sm:$0xff] %v1272
        %s1289 = sand.u32 %s255, 1
        %s1290 = scalar_lea.sflag [#allocation4], %s1289
        %s1291 = sand.u32 %s255, 1
        %s1292 = smul.addr %s1291, 128
        %s1293 = scalar_lea.vmem [#allocation5], %s1292
        // Predicated region
        $region65: #{tpu_custom_call.1} parent=59 // pred_check
          %p1294 = pneg %p265
        $region66: #{tpu_custom_call.1} parent=59 // pred_check_branch
          %1296 = sbr.rel (%p1294) target = $region68
        $region67: #{tpu_custom_call.1} parent=59 // pred_region
          %s1298 = ssub.s32 2048, 2048
          %1299 = vsyncadd %s1290, %s1298
          %s1300 = smul.addr %s27, 16
          %s1301 = smul.addr %s1300, 128
          %s1302 = scalar_lea.hbm %s10, %s1301
          %s1303 = sshll.u32 %s1293, 4
          %s1304 = int_to_ptr.vmem [resolvable:$true] %s1303
          %1309 = dma.vmem_to_hbm [thread:$0]  %s1304, 2048, %s1302, %s1290, 256, 256, 16
        $region68: #{tpu_custom_call.1} parent=59 // pred_fallthru
          _
      $region60: #{tpu_custom_call.1} parent=5 // pred_fallthru
        _
      %p1310 = scmp.le.s32.totalorder 2, %s22
      // Predicated region
      $region69: #{tpu_custom_call.1} parent=5 // pred_check
        %p1311 = pneg %p1310
      $region70: #{tpu_custom_call.1} parent=5 // pred_check_branch
        %1313 = sbr.rel (%p1311) target = $region72
      $region71: #{tpu_custom_call.1} parent=5 // pred_region
        %s1314 = ssub.s32 %s22, 2
        // Predicated region
        $region73: #{tpu_custom_call.1} parent=71 // pred_check
          %p1315 = pneg %p271
        $region74: #{tpu_custom_call.1} parent=71 // pred_check_branch
          %1317 = sbr.rel (%p1315) target = $region76
        $region75: #{tpu_custom_call.1} parent=71 // pred_region
          %s1318 = sand.u32 %s256, 1
          %s1319 = scalar_lea.sflag [#allocation4], %s1318
          %s1320 = sand.u32 %s256, 1
          %s1321 = smul.addr %s1320, 128
          %s1322 = scalar_lea.vmem [#allocation5], %s1321
          %1323 = dma.done %s1319, 2048
        $region76: #{tpu_custom_call.1} parent=71 // pred_fallthru
          _
      $region72: #{tpu_custom_call.1} parent=5 // pred_fallthru
        _
    $region6: #{tpu_custom_call.1} parent=1 // loop_footer
      %s26 = sadd.s32 1, %s22
    $region7: #{tpu_custom_call.1} parent=1 // loop_footer_branch
      %21 = sbr.rel target = $region3
    $region8: #{tpu_custom_call.1} parent=1 // loop_exit
      _
    %1324 = vsyncpa [#allocation3], 1
    %s1325 = scalar_lea.sflag [#allocation3], 1
    %1326 = vsyncpa %s1325, 1
    %1327 = vsyncpa [#allocation4], 1
    %s1328 = scalar_lea.sflag [#allocation4], 1
    %1329 = vsyncpa %s1328, 1

</llo_original>
